<compile_context>
chip_gen: v6e
topology: v6e:2x2x1
jax: 0.10.0
libtpu: 0.0.40
codegen_flags: <defaults>
</compile_context>

<pallas_src>
import functools

import numpy as np

import jax
import jax.numpy as jnp
from jax.experimental import pallas as pl
from jax.experimental.pallas import tpu as pltpu


# ----------------------------- plain-JAX helper (reference only) ---------------
def concatenate_coords(x):
    """x: (N, C, H, W). Appends x- and y-coordinate channels in [-0.5, 0.5)."""
    n, c, h, w = x.shape
    xs = (jnp.arange(w, dtype=jnp.float32) + 0.5) / w - 0.5   # varies along width
    ys = (jnp.arange(h, dtype=jnp.float32) + 0.5) / h - 0.5   # varies along height
    xc = jnp.broadcast_to(xs[None, :], (h, w))
    yc = jnp.broadcast_to(ys[:, None], (h, w))
    coords = jnp.stack([xc, yc], axis=0).astype(x.dtype)       # (2, H, W): x first, then y
    coords = jnp.broadcast_to(coords[None], (n, 2, h, w))
    return jnp.concatenate([x, coords], axis=1)


# ----------------------------- Pallas kernel ----------------------------------
def _coord_convt_kernel(x_ref, w_ref, mw_ref, cb_ref, out_ref, *,
                        H, WO, KH, KW, COUT, S, P):
    # x_ref:  (1, C, H*W)        one batch element, flat spatial, channel-major
    # w_ref:  (KW*KH*COUT, C)    data-channel weights, rows ordered (kw, kh, cout)
    # mw_ref: (KW*H*W, H*WO)     precomputed 0/1 width-scatter constant
    # cb_ref: (COUT, S*H*WO)     precomputed coord-channel + bias map (phase-planar layout)
    # out_ref:(1, COUT, S*H*WO)  output, phase-planar layout (de-interleaved in the wrapper)
    f32 = jnp.float32
    HWO = H * WO

    x = x_ref[...][0].astype(f32)                              # (C, H*W)
    w = w_ref[...].astype(f32)                                 # (KW*KH*COUT, C)

    # 1) channel contraction on the MXU: rows (kw, kh, cout)
    v = jnp.dot(w, x, preferred_element_type=f32)              # (KW*KH*COUT, H*W)

    # 2) move kw onto the lane axis (8/128-aligned slices + lane concat: vreg copies only)
    nkh = KH * COUT
    t = jnp.concatenate([v[kw * nkh:(kw + 1) * nkh, :] for kw in range(KW)],
                        axis=1)                                # (KH*COUT, KW*H*W)

    # 3) width placement iw -> ow = S*iw - P + kw via one matmul against the 0/1 constant
    s = jnp.dot(t, mw_ref[...], preferred_element_type=f32)    # (KH*COUT, H*WO)

    # 4) height placement ih -> oh = S*ih - P + kh, register-resident phase decomposition:
    #    oh = S*m + r with r = (kh-P) % S and m = ih + (kh-P) // S  ->  per-kh contribution is
    #    a full-width WO-block lane shift added into phase canvas r.  No masked RMW stores.
    phases = [jnp.zeros((COUT, HWO), f32) for _ in range(S)]
    for kh in range(KH):
        d = kh - P
        r = d % S
        q = d // S
        if q >= H or q <= -H:
            continue                                           # entirely out of range
        blk = s[kh * COUT:(kh + 1) * COUT, :]                  # (COUT, H*WO)
        if q > 0:
            sh = jnp.concatenate(
                [jnp.zeros((COUT, q * WO), f32), blk[:, :(H - q) * WO]], axis=1)
        elif q < 0:
            sh = jnp.concatenate(
                [blk[:, (-q) * WO:], jnp.zeros((COUT, (-q) * WO), f32)], axis=1)
        else:
            sh = blk
        phases[r] = phases[r] + sh

    res = jnp.concatenate(phases, axis=1)                      # (COUT, S*H*WO), phase-planar
    out = res + cb_ref[...]                                    # coord channels + bias constant
    out_ref[...] = out.reshape(out_ref.shape).astype(out_ref.dtype)   # one lane-dense store


def coord_conv_transpose2d(x_nchw, weight, bias, *, stride, padding, output_padding):
    """Forward pass of CoordConvTranspose2d.

    x_nchw: (N, Cin, H, W)
    weight: (Cin+2, Cout, KH, KW)   (PyTorch ConvTranspose2d layout)
    bias:   (Cout,)
    returns (N, Cout, Ho, Wo)
    """
    n, cin, h, w = x_nchw.shape
    cin2, cout, kh, kw = weight.shape
    assert cin2 == cin + 2
    s_, p_ = stride, padding

    ho = (h - 1) * s_ - 2 * p_ + kh + output_padding
    wo = (w - 1) * s_ - 2 * p_ + kw + output_padding
    # TODO(synk): phase-planar height assembly assumes Ho == stride*H (true for the usual
    # K=2S, P=S/2 upsampling deconv, incl. this module's config); generalize if needed.
    assert ho == s_ * h, "requires kh + output_padding == 2*padding + stride"

    f32 = jnp.float32

    # --- data-channel weight, rows ordered (kw outer, kh, cout inner) ------------------
    wd = jnp.transpose(weight[:cin], (3, 2, 1, 0)).reshape(kw * kh * cout, cin).astype(f32)

    # --- constant: coord-channel contribution + bias (data-independent, tiny) ----------
    xs = (jnp.arange(w, dtype=f32) + 0.5) / w - 0.5
    ys = (jnp.arange(h, dtype=f32) + 0.5) / h - 0.5
    coords = jnp.stack([jnp.broadcast_to(xs[None, :], (h, w)),
                        jnp.broadcast_to(ys[:, None], (h, w))], axis=0)[None]      # (1,2,H,W)
    wc_flip = jnp.transpose(weight[cin:, :, ::-1, ::-1], (1, 0, 2, 3)).astype(f32)  # (Cout,2,KH,KW)
    coord_term = jax.lax.conv_general_dilated(
        coords.astype(f32), wc_flip, window_strides=(1, 1),
        padding=[(kh - 1 - p_, kh - 1 - p_ + output_padding),
                 (kw - 1 - p_, kw - 1 - p_ + output_padding)],
        lhs_dilation=(s_, s_), rhs_dilation=(1, 1),
        dimension_numbers=("NCHW", "OIHW", "NCHW"),
        precision=jax.lax.Precision.HIGHEST)[0]                                     # (Cout,Ho,Wo)
    cb = coord_term + bias.astype(f32)[:, None, None]
    # to phase-planar layout: oh = m*S + r  ->  lane index r*H*Wo + m*Wo + ow
    cb_pp = cb.reshape(cout, h, s_, wo).transpose(0, 2, 1, 3).reshape(cout, s_ * h * wo)

    # --- constant: width-scatter 0/1 matrix (KW*H*W, H*WO), built host-side --------------
    iw = np.arange(w)
    ow = np.arange(wo)
    ow_tgt = s_ * iw[None, :] - p_ + np.arange(kw)[:, None]                    # (KW, W)
    mw_small = (ow[None, None, :] == ow_tgt[:, :, None]).astype(np.float32)    # (KW, W, WO)
    eye_h = np.eye(h, dtype=np.float32)
    mw = eye_h[None, :, None, :, None] * mw_small[:, None, :, None, :]         # (KW,H,W,H,WO)
    mw = jnp.asarray(mw.reshape(kw * h * w, h * wo))                           # 2 MiB constant

    x_flat = x_nchw.reshape(n, cin, h * w)                     # free contiguous reshape

    kernel = functools.partial(
        _coord_convt_kernel, H=h, WO=wo, KH=kh, KW=kw, COUT=cout, S=s_, P=p_)

    out_pp = pl.pallas_call(
        kernel,
        out_shape=jax.ShapeDtypeStruct((n, cout, s_ * h * wo), x_nchw.dtype),
        grid=(n,),
        in_specs=[
            pl.BlockSpec((1, cin, h * w), lambda i: (i, 0, 0)),
            pl.BlockSpec((kw * kh * cout, cin), lambda i: (0, 0)),
            pl.BlockSpec((kw * h * w, h * wo), lambda i: (0, 0)),       # constant, stays resident
            pl.BlockSpec((cout, s_ * h * wo), lambda i: (0, 0)),        # constant, stays resident
        ],
        out_specs=pl.BlockSpec((1, cout, s_ * h * wo), lambda i: (i, 0, 0)),
        compiler_params=pltpu.CompilerParams(dimension_semantics=("parallel",)),
    )(x_flat, wd, mw, cb_pp)

    # de-interleave phase-planar -> row-major NCHW (64 KiB transpose, fuses under jit)
    out = out_pp.reshape(n, cout, s_, h, wo).transpose(0, 1, 3, 2, 4).reshape(n, cout, ho, wo)
    return out


# ----------------------------- reference + main --------------------------------
def _reference(x_nchw, weight, bias, *, stride, padding, output_padding):
    x_cat = concatenate_coords(x_nchw)
    cin2, cout, kh, kw = weight.shape
    w_flip = jnp.transpose(weight[:, :, ::-1, ::-1], (1, 0, 2, 3))   # (Cout, Cin2, KH, KW)
    pb_h, pe_h = kh - 1 - padding, kh - 1 - padding + output_padding
    pb_w, pe_w = kw - 1 - padding, kw - 1 - padding + output_padding
    out = jax.lax.conv_general_dilated(
        x_cat, w_flip,
        window_strides=(1, 1),
        padding=[(pb_h, pe_h), (pb_w, pe_w)],
        lhs_dilation=(stride, stride),
        rhs_dilation=(1, 1),
        dimension_numbers=("NCHW", "OIHW", "NCHW"),
        precision=jax.lax.Precision.HIGHEST,
    )
    return out + bias[None, :, None, None]


if __name__ == "__main__":
    # Module config: CoordConvTranspose2d(in_channels=4, out_channels=8,
    #                kernel_size=4, stride=2, padding=1, output_padding=0)
    N, CIN, H, W = 2, 4, 16, 16
    COUT, K, STRIDE, PAD, OUT_PAD = 8, 4, 2, 1, 0

    key = jax.random.PRNGKey(0)
    kx, kw_, kb = jax.random.split(key, 3)
    x = jax.random.normal(kx, (N, CIN, H, W), dtype=jnp.float32)
    weight = 0.1 * jax.random.normal(kw_, (CIN + 2, COUT, K, K), dtype=jnp.float32)
    bias = 0.1 * jax.random.normal(kb, (COUT,), dtype=jnp.float32)

    fwd = jax.jit(functools.partial(coord_conv_transpose2d,
                                    stride=STRIDE, padding=PAD, output_padding=OUT_PAD))
    out = jax.block_until_ready(fwd(x, weight, bias))

    ref = jax.block_until_ready(
        _reference(x, weight, bias, stride=STRIDE, padding=PAD, output_padding=OUT_PAD))

    expected_hw = (H - 1) * STRIDE - 2 * PAD + K + OUT_PAD
    assert out.shape == (N, COUT, expected_hw, expected_hw), out.shape
    assert jnp.allclose(out, ref, atol=1e-4, rtol=1e-4), float(jnp.max(jnp.abs(out - ref)))

    print("KERNEL_OK")
</pallas_src>

<mosaic_0001>
module attributes {stable_mosaic.version = 11 : i64} {
  func.func @_coord_convt_kernel(%arg0: i32, %arg1: memref<1x4x256xf32, #tpu.memory_space<vmem>>, %arg2: memref<128x4xf32, #tpu.memory_space<vmem>>, %arg3: memref<1024x512xf32, #tpu.memory_space<vmem>>, %arg4: memref<8x1024xf32, #tpu.memory_space<vmem>>, %arg5: memref<1x8x1024xf32, #tpu.memory_space<vmem>>) attributes {dimension_semantics = [#tpu.dimension_semantics<parallel>], iteration_bounds = array<i64: 2>, scalar_prefetch = 0 : i64, scratch_operands = 0 : i64, tpu.core_type = #tpu.core_type<tc>, window_params = [{transform_indices = @transform_0, window_bounds = array<i64: 1, 4, 256>}, {pipeline_mode = #tpu.pipeline_mode<synchronous>, transform_indices = @transform_1, window_bounds = array<i64: 128, 4>}, {pipeline_mode = #tpu.pipeline_mode<synchronous>, transform_indices = @transform_2, window_bounds = array<i64: 1024, 512>}, {pipeline_mode = #tpu.pipeline_mode<synchronous>, transform_indices = @transform_3, window_bounds = array<i64: 8, 1024>}, {transform_indices = @transform_4, window_bounds = array<i64: 1, 8, 1024>}]} {
    %c0 = arith.constant 0 : index
    %c0_0 = arith.constant 0 : index
    %c0_1 = arith.constant 0 : index
    %0 = vector.load %arg1[%c0, %c0_0, %c0_1] : memref<1x4x256xf32, #tpu.memory_space<vmem>>, vector<1x4x256xf32>
    %1 = vector.shape_cast %0 : vector<1x4x256xf32> to vector<4x256xf32>
    %c0_2 = arith.constant 0 : index
    %c0_3 = arith.constant 0 : index
    %2 = vector.load %arg2[%c0_2, %c0_3] : memref<128x4xf32, #tpu.memory_space<vmem>>, vector<128x4xf32>
    %cst = arith.constant dense<0.000000e+00> : vector<128x256xf32>
    %3 = tpu.matmul %2, %1, %cst {dimension_numbers = #tpu.dot_dimension_numbers<[1], [0], [0], [1], [0, 0, 1, 1], [], []>} : vector<128x4xf32>, vector<4x256xf32>, vector<128x256xf32> -> vector<128x256xf32>
    %4 = vector.extract_strided_slice %3 {offsets = [0, 0], sizes = [32, 256], strides = [1, 1]} : vector<128x256xf32> to vector<32x256xf32>
    %5 = vector.extract_strided_slice %3 {offsets = [32, 0], sizes = [32, 256], strides = [1, 1]} : vector<128x256xf32> to vector<32x256xf32>
    %6 = vector.extract_strided_slice %3 {offsets = [64, 0], sizes = [32, 256], strides = [1, 1]} : vector<128x256xf32> to vector<32x256xf32>
    %7 = vector.extract_strided_slice %3 {offsets = [96, 0], sizes = [32, 256], strides = [1, 1]} : vector<128x256xf32> to vector<32x256xf32>
    %8 = tpu.concatenate %4, %5, %6, %7 in 1 : vector<32x256xf32>, vector<32x256xf32>, vector<32x256xf32>, vector<32x256xf32> -> vector<32x1024xf32>
    %c0_4 = arith.constant 0 : index
    %c0_5 = arith.constant 0 : index
    %9 = vector.load %arg3[%c0_4, %c0_5] : memref<1024x512xf32, #tpu.memory_space<vmem>>, vector<1024x512xf32>
    %cst_6 = arith.constant dense<0.000000e+00> : vector<32x512xf32>
    %10 = tpu.matmul %8, %9, %cst_6 {dimension_numbers = #tpu.dot_dimension_numbers<[1], [0], [0], [1], [0, 0, 1, 1], [], []>} : vector<32x1024xf32>, vector<1024x512xf32>, vector<32x512xf32> -> vector<32x512xf32>
    %cst_7 = arith.constant 0.000000e+00 : f32
    %11 = vector.broadcast %cst_7 : f32 to vector<8x512xf32>
    %cst_8 = arith.constant 0.000000e+00 : f32
    %12 = vector.broadcast %cst_8 : f32 to vector<8x512xf32>
    %13 = vector.extract_strided_slice %10 {offsets = [0, 0], sizes = [8, 512], strides = [1, 1]} : vector<32x512xf32> to vector<8x512xf32>
    %14 = vector.extract_strided_slice %13 {offsets = [0, 32], sizes = [8, 480], strides = [1, 1]} : vector<8x512xf32> to vector<8x480xf32>
    %cst_9 = arith.constant 0.000000e+00 : f32
    %15 = vector.broadcast %cst_9 : f32 to vector<8x32xf32>
    %16 = tpu.concatenate %14, %15 in 1 : vector<8x480xf32>, vector<8x32xf32> -> vector<8x512xf32>
    %17 = arith.addf %12, %16 : vector<8x512xf32>
    %18 = vector.extract_strided_slice %10 {offsets = [8, 0], sizes = [8, 512], strides = [1, 1]} : vector<32x512xf32> to vector<8x512xf32>
    %19 = arith.addf %11, %18 : vector<8x512xf32>
    %20 = vector.extract_strided_slice %10 {offsets = [16, 0], sizes = [8, 512], strides = [1, 1]} : vector<32x512xf32> to vector<8x512xf32>
    %21 = arith.addf %17, %20 : vector<8x512xf32>
    %22 = vector.extract_strided_slice %10 {offsets = [24, 0], sizes = [8, 512], strides = [1, 1]} : vector<32x512xf32> to vector<8x512xf32>
    %cst_10 = arith.constant 0.000000e+00 : f32
    %23 = vector.broadcast %cst_10 : f32 to vector<8x32xf32>
    %24 = vector.extract_strided_slice %22 {offsets = [0, 0], sizes = [8, 480], strides = [1, 1]} : vector<8x512xf32> to vector<8x480xf32>
    %25 = tpu.concatenate %23, %24 in 1 : vector<8x32xf32>, vector<8x480xf32> -> vector<8x512xf32>
    %26 = arith.addf %19, %25 : vector<8x512xf32>
    %27 = tpu.concatenate %26, %21 in 1 : vector<8x512xf32>, vector<8x512xf32> -> vector<8x1024xf32>
    %c0_11 = arith.constant 0 : index
    %c0_12 = arith.constant 0 : index
    %28 = vector.load %arg4[%c0_11, %c0_12] : memref<8x1024xf32, #tpu.memory_space<vmem>>, vector<8x1024xf32>
    %29 = arith.addf %27, %28 : vector<8x1024xf32>
    %30 = vector.shape_cast %29 : vector<8x1024xf32> to vector<1x8x1024xf32>
    %c0_13 = arith.constant 0 : index
    %c0_14 = arith.constant 0 : index
    %c0_15 = arith.constant 0 : index
    %31 = vector.load %arg5[%c0_13, %c0_14, %c0_15] : memref<1x8x1024xf32, #tpu.memory_space<vmem>>, vector<1x8x1024xf32>
    tpu.vector_store %arg5[%c0_13, %c0_14, %c0_15], %30 {strides = array<i32>} : memref<1x8x1024xf32, #tpu.memory_space<vmem>>, vector<1x8x1024xf32>,
    return
  }
  func.func @transform_0(%arg0: i32) -> (i32, i32, i32) {
    %c0_i32 = arith.constant 0 : i32
    %c0_i32_0 = arith.constant 0 : i32
    %c0_i32_1 = arith.constant 0 : i32
    return %arg0, %c0_i32, %c0_i32_0 : i32, i32, i32
  }
  func.func @transform_1(%arg0: i32) -> (i32, i32) {
    %c0_i32 = arith.constant 0 : i32
    %c0_i32_0 = arith.constant 0 : i32
    %c0_i32_1 = arith.constant 0 : i32
    return %c0_i32, %c0_i32_0 : i32, i32
  }
  func.func @transform_2(%arg0: i32) -> (i32, i32) {
    %c0_i32 = arith.constant 0 : i32
    %c0_i32_0 = arith.constant 0 : i32
    %c0_i32_1 = arith.constant 0 : i32
    return %c0_i32, %c0_i32_0 : i32, i32
  }
  func.func @transform_3(%arg0: i32) -> (i32, i32) {
    %c0_i32 = arith.constant 0 : i32
    %c0_i32_0 = arith.constant 0 : i32
    %c0_i32_1 = arith.constant 0 : i32
    return %c0_i32, %c0_i32_0 : i32, i32
  }
  func.func @transform_4(%arg0: i32) -> (i32, i32, i32) {
    %c0_i32 = arith.constant 0 : i32
    %c0_i32_0 = arith.constant 0 : i32
    %c0_i32_1 = arith.constant 0 : i32
    return %arg0, %c0_i32, %c0_i32_0 : i32, i32, i32
  }
}

</mosaic_0001>

<llo_original>
// kernel: coord_conv_transpose2d.1
$region0: #{coord_conv_transpose2d.1}
  #allocation0 [shape = 'u32[]', space=smem, size = 0x4, offset = 0x4, fixed_abs, tag = 'smem constant byte address 0x4 - core index']
  #allocation1 [shape = 'u32[144,128]{1,0:T(1,128)}', space=vmem, size = 0x12000, scoped, tag = 'internal scratch']
  %s0 = inlined_call_operand.vmem [shape: f32[2,4,256], index: 0, kind: input, shape index: {}]
  %s1 = inlined_call_operand.vmem [shape: f32[128,4], index: 1, kind: input, shape index: {}]
  %s2 = inlined_call_operand.vmem [shape: f32[1024,512], index: 2, kind: input, shape index: {}]
  %s3 = inlined_call_operand.vmem [shape: f32[8,1024], index: 3, kind: input, shape index: {}]
  %s4 = inlined_call_operand.vmem [shape: f32[2,8,1024], index: 4, kind: output, shape index: {}]
  %s5 = sld [smem:[#allocation0]]
  $region49: #{coord_conv_transpose2d.1} parent=0
    _
  %s7 = ssub.s32 1, %s5
  %s8 = scalar_select 0, %s7, %s5
  loop: start=0, step=1, limit=4
  $region2: #{coord_conv_transpose2d.1} parent=0 // loop_pre_header
    _
  $region3: #{coord_conv_transpose2d.1} parent=0 // loop_header
    %s10 = sphi 0, %s14
    %p11 = scmp.ge.s32.totalorder %s10, 4
    %s20 = sphi 0, %s22
    %s23 = sphi 0, %s20
    %s24 = sphi 0, %s23
    %s40 = sphi 0, %s24
    %s44 = sphi 0, %s44
    %s46 = sphi 0, %s44
    %s47 = sphi 0, %s46
    %s61 = sphi 0, %s47
    %s65 = sphi 0, %s65
    %s67 = sphi 0, %s65
    %s68 = sphi 0, %s67
    %s82 = sphi 0, %s68
    %s86 = sphi 0, %s86
    %s88 = sphi 0, %s86
    %s89 = sphi 0, %s88
    %s103 = sphi 0, %s89
    %s109 = sphi 0, %s111
    %s112 = sphi 0, %s109
    %s113 = sphi 0, %s112
    %s129 = sphi 0, %s113
  $region4: #{coord_conv_transpose2d.1} parent=0 // loop_header_branch
    %13 = sbr.rel (%p11) target = $region8
  $region5: #{coord_conv_transpose2d.1} parent=0 // loop_body
    %s15 = ssub.s32 %s10, 1
    %s16 = ssub.s32 %s10, 2
    %s17 = sadd.s32 %s10, 1
    %s18 = ssub.s32 %s10, %s17
    %p19 = scmp.eq.s32.totalorder %s18, 0
    %s21 = sadd.s32 %s20, 1
    %s22 = scalar_select %p19, %s20, %s21
    %p25 = pneg %p19
    %p26 = scmp.eq.s32.totalorder %s10, 1
    %p27 = por %p25, %p26
    %p28 = scmp.ne.s32.totalorder %s20, %s23
    %p29 = scmp.eq.s32.totalorder %s10, 0
    %p30 = por %p28, %p29
    %p31 = scmp.ne.s32.totalorder %s20, %s23
    %p32 = scmp.eq.s32.totalorder %s15, 1
    %p33 = por %p31, %p32
    %p34 = scmp.ne.s32.totalorder %s23, %s24
    %p35 = scmp.eq.s32.totalorder %s15, 0
    %p36 = por %p34, %p35
    %p37 = scmp.ne.s32.totalorder %s23, %s24
    %p38 = scmp.eq.s32.totalorder %s16, 1
    %p39 = por %p37, %p38
    %p41 = scmp.ne.s32.totalorder %s24, %s40
    %p42 = scmp.eq.s32.totalorder %s16, 0
    %p43 = por %p41, %p42
    %s45 = sadd.s32 %s44, 1
    %p48 = scmp.eq.s32.totalorder %s10, 1
    %p49 = scmp.ne.s32.totalorder %s44, %s46
    %p50 = scmp.eq.s32.totalorder %s10, 0
    %p51 = por %p49, %p50
    %p52 = scmp.ne.s32.totalorder %s44, %s46
    %p53 = scmp.eq.s32.totalorder %s15, 1
    %p54 = por %p52, %p53
    %p55 = scmp.ne.s32.totalorder %s46, %s47
    %p56 = scmp.eq.s32.totalorder %s15, 0
    %p57 = por %p55, %p56
    %p58 = scmp.ne.s32.totalorder %s46, %s47
    %p59 = scmp.eq.s32.totalorder %s16, 1
    %p60 = por %p58, %p59
    %p62 = scmp.ne.s32.totalorder %s47, %s61
    %p63 = scmp.eq.s32.totalorder %s16, 0
    %p64 = por %p62, %p63
    %s66 = sadd.s32 %s65, 1
    %p69 = scmp.eq.s32.totalorder %s10, 1
    %p70 = scmp.ne.s32.totalorder %s65, %s67
    %p71 = scmp.eq.s32.totalorder %s10, 0
    %p72 = por %p70, %p71
    %p73 = scmp.ne.s32.totalorder %s65, %s67
    %p74 = scmp.eq.s32.totalorder %s15, 1
    %p75 = por %p73, %p74
    %p76 = scmp.ne.s32.totalorder %s67, %s68
    %p77 = scmp.eq.s32.totalorder %s15, 0
    %p78 = por %p76, %p77
    %p79 = scmp.ne.s32.totalorder %s67, %s68
    %p80 = scmp.eq.s32.totalorder %s16, 1
    %p81 = por %p79, %p80
    %p83 = scmp.ne.s32.totalorder %s68, %s82
    %p84 = scmp.eq.s32.totalorder %s16, 0
    %p85 = por %p83, %p84
    %s87 = sadd.s32 %s86, 1
    %p90 = scmp.eq.s32.totalorder %s10, 1
    %p91 = scmp.ne.s32.totalorder %s86, %s88
    %p92 = scmp.eq.s32.totalorder %s10, 0
    %p93 = por %p91, %p92
    %p94 = scmp.ne.s32.totalorder %s86, %s88
    %p95 = scmp.eq.s32.totalorder %s15, 1
    %p96 = por %p94, %p95
    %p97 = scmp.ne.s32.totalorder %s88, %s89
    %p98 = scmp.eq.s32.totalorder %s15, 0
    %p99 = por %p97, %p98
    %p100 = scmp.ne.s32.totalorder %s88, %s89
    %p101 = scmp.eq.s32.totalorder %s16, 1
    %p102 = por %p100, %p101
    %p104 = scmp.ne.s32.totalorder %s89, %s103
    %p105 = scmp.eq.s32.totalorder %s16, 0
    %p106 = por %p104, %p105
    %s107 = ssub.s32 %s10, %s17
    %p108 = scmp.eq.s32.totalorder %s107, 0
    %s110 = sadd.s32 %s109, 1
    %s111 = scalar_select %p108, %s109, %s110
    %p114 = pneg %p108
    %p115 = scmp.eq.s32.totalorder %s10, 1
    %p116 = por %p114, %p115
    %p117 = scmp.ne.s32.totalorder %s109, %s112
    %p118 = scmp.eq.s32.totalorder %s10, 0
    %p119 = por %p117, %p118
    %p120 = scmp.ne.s32.totalorder %s109, %s112
    %p121 = scmp.eq.s32.totalorder %s15, 1
    %p122 = por %p120, %p121
    %p123 = scmp.ne.s32.totalorder %s112, %s113
    %p124 = scmp.eq.s32.totalorder %s15, 0
    %p125 = por %p123, %p124
    %p126 = scmp.ne.s32.totalorder %s112, %s113
    %p127 = scmp.eq.s32.totalorder %s16, 1
    %p128 = por %p126, %p127
    %p130 = scmp.ne.s32.totalorder %s113, %s129
    %p131 = scmp.eq.s32.totalorder %s16, 0
    %p132 = por %p130, %p131
    %p133 = scmp.le.s32.totalorder 1, %s10
    %p134 = scmp.lt.s32.totalorder %s10, 3
    %p135 = pnand %p133, %p134
    %p136 = pneg %p135
    // Predicated region
    $region9: #{coord_conv_transpose2d.1} parent=5 // pred_check
      _
    $region10: #{coord_conv_transpose2d.1} parent=5 // pred_check_branch
      %138 = sbr.rel (%p135) target = $region12
    $region11: #{coord_conv_transpose2d.1} parent=5 // pred_region
      %s139 = ssub.s32 %s10, 1
      // Predicated region
      $region13: #{coord_conv_transpose2d.1} parent=11 // pred_check
        %p140 = pneg %p57
      $region14: #{coord_conv_transpose2d.1} parent=11 // pred_check_branch
        %142 = sbr.rel (%p140) target = $region16
      $region15: #{coord_conv_transpose2d.1} parent=11 // pred_region
        _
      $region16: #{coord_conv_transpose2d.1} parent=11 // pred_fallthru
        _
      // Predicated region
      $region17: #{coord_conv_transpose2d.1} parent=11 // pred_check
        %p143 = pneg %p78
      $region18: #{coord_conv_transpose2d.1} parent=11 // pred_check_branch
        %145 = sbr.rel (%p143) target = $region20
      $region19: #{coord_conv_transpose2d.1} parent=11 // pred_region
        _
      $region20: #{coord_conv_transpose2d.1} parent=11 // pred_fallthru
        _
      // Predicated region
      $region21: #{coord_conv_transpose2d.1} parent=11 // pred_check
        %p146 = pneg %p99
      $region22: #{coord_conv_transpose2d.1} parent=11 // pred_check_branch
        %148 = sbr.rel (%p146) target = $region24
      $region23: #{coord_conv_transpose2d.1} parent=11 // pred_region
        _
      $region24: #{coord_conv_transpose2d.1} parent=11 // pred_fallthru
        _
    $region12: #{coord_conv_transpose2d.1} parent=5 // pred_fallthru
      _
    %p149 = scmp.lt.s32.totalorder %s10, 2
    // Predicated region
    $region25: #{coord_conv_transpose2d.1} parent=5 // pred_check
      %p150 = pneg %p149
    $region26: #{coord_conv_transpose2d.1} parent=5 // pred_check_branch
      %152 = sbr.rel (%p150) target = $region28
    $region27: #{coord_conv_transpose2d.1} parent=5 // pred_region
      // Predicated region
      $region29: #{coord_conv_transpose2d.1} parent=27 // pred_check
        %p153 = pneg %p30
      $region30: #{coord_conv_transpose2d.1} parent=27 // pred_check_branch
        %155 = sbr.rel (%p153) target = $region32
      $region31: #{coord_conv_transpose2d.1} parent=27 // pred_region
        %p156 = scmp.lt.s32.totalorder %s10, 1
        %s157 = scalar_select %p156, %s10, 1
        %s158 = smul.addr %s157, 2
        %s159 = smul.addr %s158, 4
        %s160 = scalar_lea.vmem %s0, %s159
      $region32: #{coord_conv_transpose2d.1} parent=27 // pred_fallthru
        _
    $region28: #{coord_conv_transpose2d.1} parent=5 // pred_fallthru
      _
    %p161 = scmp.le.s32.totalorder 1, %s10
    %p162 = scmp.lt.s32.totalorder %s10, 3
    %p163 = pnand %p161, %p162
    %p164 = pneg %p163
    // Predicated region
    $region33: #{coord_conv_transpose2d.1} parent=5 // pred_check
      _
    $region34: #{coord_conv_transpose2d.1} parent=5 // pred_check_branch
      %166 = sbr.rel (%p163) target = $region36
    $region35: #{coord_conv_transpose2d.1} parent=5 // pred_region
      %s167 = ssub.s32 %s10, 1
      %p168 = scmp.lt.s32.totalorder %s15, 1
      %s169 = scalar_select %p168, %s15, 1
      %s170 = smul.addr %s169, 2
      %s171 = smul.addr %s170, 4
      %s172 = scalar_lea.vmem %s0, %s171
      %p173 = pneg %p36
      %p174 = pneg %p33
      %p175 = pneg %p57
      %p176 = pneg %p54
      %p177 = pneg %p78
      %p178 = pneg %p75
      %p179 = pneg %p99
      %p180 = pneg %p96
      %p181 = pneg %p125
      %p182 = pneg %p122
      %p183 = scmp.lt.s32.totalorder %s15, 1
      %s184 = scalar_select %p183, %s15, 1
      %s185 = smul.addr %s184, 8
      %s186 = smul.addr %s185, 8
      %s187 = scalar_lea.vmem %s4, %s186
      %p188 = scmp.lt.s32.totalorder %s15, 1
      %s189 = scalar_select %p188, %s15, 1
      %s190 = smul.addr %s189, 2
      %s191 = smul.addr %s190, 4
      %s192 = scalar_lea.vmem %s0, %s191
      %p193 = scmp.lt.s32.totalorder %s15, 1
      %s194 = scalar_select %p193, %s15, 1
      %s195 = smul.addr %s194, 8
      %s196 = smul.addr %s195, 8
      %s197 = scalar_lea.vmem %s4, %s196
      %v198 = vld [vmem:[%s192] sm:$0xff]
      %v199 = vld [vmem:[%s1] sm:$0xff]
      %v200 = vld [vmem:[%s1 + $0x8] sm:$0xff]
      %v201 = vld [vmem:[%s1 + $0x10] sm:$0xff]
      %v202 = vld [vmem:[%s1 + $0x18] sm:$0xff]
      %v203 = vld [vmem:[%s1 + $0x20] sm:$0xff]
      %v204 = vld [vmem:[%s1 + $0x28] sm:$0xff]
      %v205 = vld [vmem:[%s1 + $0x30] sm:$0xff]
      %v206 = vld [vmem:[%s1 + $0x38] sm:$0xff]
      %v207 = vld [vmem:[%s1 + $0x40] sm:$0xff]
      %v208 = vld [vmem:[%s1 + $0x48] sm:$0xff]
      %v209 = vld [vmem:[%s1 + $0x50] sm:$0xff]
      %v210 = vld [vmem:[%s1 + $0x58] sm:$0xff]
      %v211 = vld [vmem:[%s1 + $0x60] sm:$0xff]
      %v212 = vld [vmem:[%s1 + $0x68] sm:$0xff]
      %v213 = vld [vmem:[%s1 + $0x70] sm:$0xff]
      %v214 = vld [vmem:[%s1 + $0x78] sm:$0xff]
      %v216 = vcombine.high %v198, %v198
      %vm217 = vcmask 31744
      %v219 = vsel %vm217, %v199, 0
      %v222 = vsel %vm217, %v200, 0
      %v225 = vsel %vm217, %v201, 0
      %v228 = vsel %vm217, %v202, 0
      %v231 = vsel %vm217, %v203, 0
      %v234 = vsel %vm217, %v204, 0
      %v237 = vsel %vm217, %v205, 0
      %v240 = vsel %vm217, %v206, 0
      %v243 = vsel %vm217, %v207, 0
      %v246 = vsel %vm217, %v208, 0
      %v249 = vsel %vm217, %v209, 0
      %v252 = vsel %vm217, %v210, 0
      %v255 = vsel %vm217, %v211, 0
      %v258 = vsel %vm217, %v212, 0
      %v261 = vsel %vm217, %v213, 0
      %v264 = vsel %vm217, %v214, 0
      %vm266 = vcmask 1043456
      %v267 = vsel %vm266, %v198, 0
      %v269 = vsel %vm266, %v216, 0
      %271 = vmatprep.subr.mxu0 0.0
      %272 = vmatpush1.msra.mxu0 0.0
      %273 = vmatprep.subr.mxu0 0.0
      %274 = vmatpush1.msra.mxu0 0.0
      %275 = vmatprep.subr.mxu0 0.0
      %276 = vmatpush1.msra.mxu0 0.0
      %277 = vmatprep.subr.mxu0 0.0
      %278 = vmatpush1.msra.mxu0 0.0
      %279 = vmatprep.subr.mxu0 0.0
      %280 = vmatpush1.msra.mxu0 0.0
      %281 = vmatprep.subr.mxu0 0.0
      %282 = vmatpush1.msra.mxu0 0.0
      %283 = vmatprep.subr.mxu0 0.0
      %284 = vmatpush1.msra.mxu0 0.0
      %285 = vmatprep.subr.mxu0 0.0
      %286 = vmatpush1.msra.mxu0 0.0
      %287 = vmatprep.subr.mxu0 0.0
      %288 = vmatpush1.msra.mxu0 0.0
      %289 = vmatprep.subr.mxu0 0.0
      %290 = vmatpush1.msra.mxu0 0.0
      %291 = vmatprep.subr.mxu0 0.0
      %292 = vmatpush1.msra.mxu0 0.0
      %293 = vmatprep.subr.mxu0 0.0
      %294 = vmatpush1.msra.mxu0 0.0
      %295 = vmatprep.subr.mxu0 0.0
      %296 = vmatpush1.msra.mxu0 0.0
      %297 = vmatprep.subr.mxu0 0.0
      %298 = vmatpush1.msra.mxu0 0.0
      %299 = vmatprep.subr.mxu0 0.0
      %300 = vmatpush1.msra.mxu0 0.0
      %301 = vmatprep.subr.mxu0 %v269
      %302 = vmatpush1.msra.mxu0 %v267
      %303 = vmatprep.subr.mxu0 0.0
      %304 = vmatpush2.msra.mxu0 0.0
      %305 = vmatprep.subr.mxu0 0.0
      %306 = vmatpush2.msra.mxu0 0.0
      %307 = vmatprep.subr.mxu0 0.0
      %308 = vmatpush2.msra.mxu0 0.0
      %309 = vmatprep.subr.mxu0 0.0
      %310 = vmatpush2.msra.mxu0 0.0
      %311 = vmatprep.subr.mxu0 0.0
      %312 = vmatpush2.msra.mxu0 0.0
      %313 = vmatprep.subr.mxu0 0.0
      %314 = vmatpush2.msra.mxu0 0.0
      %315 = vmatprep.subr.mxu0 0.0
      %316 = vmatpush2.msra.mxu0 0.0
      %317 = vmatprep.subr.mxu0 0.0
      %318 = vmatpush2.msra.mxu0 0.0
      %319 = vmatprep.subr.mxu0 0.0
      %320 = vmatpush2.msra.mxu0 0.0
      %321 = vmatprep.subr.mxu0 0.0
      %322 = vmatpush2.msra.mxu0 0.0
      %323 = vmatprep.subr.mxu0 0.0
      %324 = vmatpush2.msra.mxu0 0.0
      %325 = vmatprep.subr.mxu0 0.0
      %326 = vmatpush2.msra.mxu0 0.0
      %327 = vmatprep.subr.mxu0 0.0
      %328 = vmatpush2.msra.mxu0 0.0
      %329 = vmatprep.subr.mxu0 0.0
      %330 = vmatpush2.msra.mxu0 0.0
      %331 = vmatprep.subr.mxu0 0.0
      %332 = vmatpush2.msra.mxu0 0.0
      %333 = vmatprep.subr.mxu0 0.0
      %334 = vmatpush2.msra.mxu0 0.0
      %335 = vmatprep.mubr.f32.mxu0 0.0
      %336 = vmatmul.mubr.f32.gmra.mxu0 %v219
      %v337 = vpop.f32.mrf.mxu0
      %v338 = vadd.f32 0.0, %v337
      %v339 = vpop.f32.mrf.mxu0
      %v340 = vadd.f32 0.0, %v339
      %341 = vmatprep.mubr.f32.mxu0 0.0
      %342 = vmatmul.mubr.f32.gmra.mxu0 %v222
      %v343 = vpop.f32.mrf.mxu0
      %v344 = vadd.f32 0.0, %v343
      %v345 = vpop.f32.mrf.mxu0
      %v346 = vadd.f32 0.0, %v345
      %347 = vmatprep.mubr.f32.mxu0 0.0
      %348 = vmatmul.mubr.f32.gmra.mxu0 %v225
      %v349 = vpop.f32.mrf.mxu0
      %v350 = vadd.f32 0.0, %v349
      %v351 = vpop.f32.mrf.mxu0
      %v352 = vadd.f32 0.0, %v351
      %353 = vmatprep.mubr.f32.mxu0 0.0
      %354 = vmatmul.mubr.f32.gmra.mxu0 %v228
      %v355 = vpop.f32.mrf.mxu0
      %v356 = vadd.f32 0.0, %v355
      %v357 = vpop.f32.mrf.mxu0
      %v358 = vadd.f32 0.0, %v357
      %359 = vmatprep.mubr.f32.mxu0 0.0
      %360 = vmatmul.mubr.f32.gmra.mxu0 %v231
      %v361 = vpop.f32.mrf.mxu0
      %v362 = vadd.f32 0.0, %v361
      %v363 = vpop.f32.mrf.mxu0
      %v364 = vadd.f32 0.0, %v363
      %365 = vmatprep.mubr.f32.mxu0 0.0
      %366 = vmatmul.mubr.f32.gmra.mxu0 %v234
      %v367 = vpop.f32.mrf.mxu0
      %v368 = vadd.f32 0.0, %v367
      %v369 = vpop.f32.mrf.mxu0
      %v370 = vadd.f32 0.0, %v369
      %371 = vmatprep.mubr.f32.mxu0 0.0
      %372 = vmatmul.mubr.f32.gmra.mxu0 %v237
      %v373 = vpop.f32.mrf.mxu0
      %v374 = vadd.f32 0.0, %v373
      %v375 = vpop.f32.mrf.mxu0
      %v376 = vadd.f32 0.0, %v375
      %377 = vmatprep.mubr.f32.mxu0 0.0
      %378 = vmatmul.mubr.f32.gmra.mxu0 %v240
      %v379 = vpop.f32.mrf.mxu0
      %v380 = vadd.f32 0.0, %v379
      %v381 = vpop.f32.mrf.mxu0
      %v382 = vadd.f32 0.0, %v381
      %383 = vmatprep.mubr.f32.mxu0 0.0
      %384 = vmatmul.mubr.f32.gmra.mxu0 %v243
      %v385 = vpop.f32.mrf.mxu0
      %v386 = vadd.f32 0.0, %v385
      %v387 = vpop.f32.mrf.mxu0
      %v388 = vadd.f32 0.0, %v387
      %389 = vmatprep.mubr.f32.mxu0 0.0
      %390 = vmatmul.mubr.f32.gmra.mxu0 %v246
      %v391 = vpop.f32.mrf.mxu0
      %v392 = vadd.f32 0.0, %v391
      %v393 = vpop.f32.mrf.mxu0
      %v394 = vadd.f32 0.0, %v393
      %395 = vmatprep.mubr.f32.mxu0 0.0
      %396 = vmatmul.mubr.f32.gmra.mxu0 %v249
      %v397 = vpop.f32.mrf.mxu0
      %v398 = vadd.f32 0.0, %v397
      %v399 = vpop.f32.mrf.mxu0
      %v400 = vadd.f32 0.0, %v399
      %401 = vmatprep.mubr.f32.mxu0 0.0
      %402 = vmatmul.mubr.f32.gmra.mxu0 %v252
      %v403 = vpop.f32.mrf.mxu0
      %v404 = vadd.f32 0.0, %v403
      %v405 = vpop.f32.mrf.mxu0
      %v406 = vadd.f32 0.0, %v405
      %407 = vmatprep.mubr.f32.mxu0 0.0
      %408 = vmatmul.mubr.f32.gmra.mxu0 %v255
      %v409 = vpop.f32.mrf.mxu0
      %v410 = vadd.f32 0.0, %v409
      %v411 = vpop.f32.mrf.mxu0
      %v412 = vadd.f32 0.0, %v411
      %413 = vmatprep.mubr.f32.mxu0 0.0
      %414 = vmatmul.mubr.f32.gmra.mxu0 %v258
      %v415 = vpop.f32.mrf.mxu0
      %v416 = vadd.f32 0.0, %v415
      %v417 = vpop.f32.mrf.mxu0
      %v418 = vadd.f32 0.0, %v417
      %419 = vmatprep.mubr.f32.mxu0 0.0
      %420 = vmatmul.mubr.f32.gmra.mxu0 %v261
      %v421 = vpop.f32.mrf.mxu0
      %v422 = vadd.f32 0.0, %v421
      %v423 = vpop.f32.mrf.mxu0
      %v424 = vadd.f32 0.0, %v423
      %425 = vmatprep.mubr.f32.mxu0 0.0
      %426 = vmatmul.mubr.f32.gmra.mxu0 %v264
      %v427 = vpop.f32.mrf.mxu0
      %v428 = vadd.f32 0.0, %v427
      %v429 = vpop.f32.mrf.mxu0
      %v430 = vadd.f32 0.0, %v429
      %431 = vdwg.mxu0
      %v432 = vld [vmem:[%s2] sm:$0xff]
      %v433 = vld [vmem:[%s2 + $0x8] sm:$0xff]
      %v434 = vld [vmem:[%s2 + $0x10] sm:$0xff]
      %v435 = vld [vmem:[%s2 + $0x18] sm:$0xff]
      %v436 = vld [vmem:[%s2 + $0x20] sm:$0xff]
      %v437 = vld [vmem:[%s2 + $0x28] sm:$0xff]
      %v438 = vld [vmem:[%s2 + $0x30] sm:$0xff]
      %v439 = vld [vmem:[%s2 + $0x38] sm:$0xff]
      %v440 = vld [vmem:[%s2 + $0x40] sm:$0xff]
      %v441 = vld [vmem:[%s2 + $0x48] sm:$0xff]
      %v442 = vld [vmem:[%s2 + $0x50] sm:$0xff]
      %v443 = vld [vmem:[%s2 + $0x58] sm:$0xff]
      %v444 = vld [vmem:[%s2 + $0x60] sm:$0xff]
      %v445 = vld [vmem:[%s2 + $0x68] sm:$0xff]
      %v446 = vld [vmem:[%s2 + $0x70] sm:$0xff]
      %v447 = vld [vmem:[%s2 + $0x78] sm:$0xff]
      %v448 = vld [vmem:[%s2 + $0x80] sm:$0xff]
      %v449 = vld [vmem:[%s2 + $0x88] sm:$0xff]
      %v450 = vld [vmem:[%s2 + $0x90] sm:$0xff]
      %v451 = vld [vmem:[%s2 + $0x98] sm:$0xff]
      %v452 = vld [vmem:[%s2 + $0xa0] sm:$0xff]
      %v453 = vld [vmem:[%s2 + $0xa8] sm:$0xff]
      %v454 = vld [vmem:[%s2 + $0xb0] sm:$0xff]
      %v455 = vld [vmem:[%s2 + $0xb8] sm:$0xff]
      %v456 = vld [vmem:[%s2 + $0xc0] sm:$0xff]
      %v457 = vld [vmem:[%s2 + $0xc8] sm:$0xff]
      %v458 = vld [vmem:[%s2 + $0xd0] sm:$0xff]
      %v459 = vld [vmem:[%s2 + $0xd8] sm:$0xff]
      %v460 = vld [vmem:[%s2 + $0xe0] sm:$0xff]
      %v461 = vld [vmem:[%s2 + $0xe8] sm:$0xff]
      %v462 = vld [vmem:[%s2 + $0xf0] sm:$0xff]
      %v463 = vld [vmem:[%s2 + $0xf8] sm:$0xff]
      %v464 = vld [vmem:[%s2 + $0x100] sm:$0xff]
      %v465 = vld [vmem:[%s2 + $0x108] sm:$0xff]
      %v466 = vld [vmem:[%s2 + $0x110] sm:$0xff]
      %v467 = vld [vmem:[%s2 + $0x118] sm:$0xff]
      %v468 = vld [vmem:[%s2 + $0x120] sm:$0xff]
      %v469 = vld [vmem:[%s2 + $0x128] sm:$0xff]
      %v470 = vld [vmem:[%s2 + $0x130] sm:$0xff]
      %v471 = vld [vmem:[%s2 + $0x138] sm:$0xff]
      %v472 = vld [vmem:[%s2 + $0x140] sm:$0xff]
      %v473 = vld [vmem:[%s2 + $0x148] sm:$0xff]
      %v474 = vld [vmem:[%s2 + $0x150] sm:$0xff]
      %v475 = vld [vmem:[%s2 + $0x158] sm:$0xff]
      %v476 = vld [vmem:[%s2 + $0x160] sm:$0xff]
      %v477 = vld [vmem:[%s2 + $0x168] sm:$0xff]
      %v478 = vld [vmem:[%s2 + $0x170] sm:$0xff]
      %v479 = vld [vmem:[%s2 + $0x178] sm:$0xff]
      %v480 = vld [vmem:[%s2 + $0x180] sm:$0xff]
      %v481 = vld [vmem:[%s2 + $0x188] sm:$0xff]
      %v482 = vld [vmem:[%s2 + $0x190] sm:$0xff]
      %v483 = vld [vmem:[%s2 + $0x198] sm:$0xff]
      %v484 = vld [vmem:[%s2 + $0x1a0] sm:$0xff]
      %v485 = vld [vmem:[%s2 + $0x1a8] sm:$0xff]
      %v486 = vld [vmem:[%s2 + $0x1b0] sm:$0xff]
      %v487 = vld [vmem:[%s2 + $0x1b8] sm:$0xff]
      %v488 = vld [vmem:[%s2 + $0x1c0] sm:$0xff]
      %v489 = vld [vmem:[%s2 + $0x1c8] sm:$0xff]
      %v490 = vld [vmem:[%s2 + $0x1d0] sm:$0xff]
      %v491 = vld [vmem:[%s2 + $0x1d8] sm:$0xff]
      %v492 = vld [vmem:[%s2 + $0x1e0] sm:$0xff]
      %v493 = vld [vmem:[%s2 + $0x1e8] sm:$0xff]
      %v494 = vld [vmem:[%s2 + $0x1f0] sm:$0xff]
      %v495 = vld [vmem:[%s2 + $0x1f8] sm:$0xff]
      %v496 = vld [vmem:[%s2 + $0x200] sm:$0xff]
      %v497 = vld [vmem:[%s2 + $0x208] sm:$0xff]
      %v498 = vld [vmem:[%s2 + $0x210] sm:$0xff]
      %v499 = vld [vmem:[%s2 + $0x218] sm:$0xff]
      %v500 = vld [vmem:[%s2 + $0x220] sm:$0xff]
      %v501 = vld [vmem:[%s2 + $0x228] sm:$0xff]
      %v502 = vld [vmem:[%s2 + $0x230] sm:$0xff]
      %v503 = vld [vmem:[%s2 + $0x238] sm:$0xff]
      %v504 = vld [vmem:[%s2 + $0x240] sm:$0xff]
      %v505 = vld [vmem:[%s2 + $0x248] sm:$0xff]
      %v506 = vld [vmem:[%s2 + $0x250] sm:$0xff]
      %v507 = vld [vmem:[%s2 + $0x258] sm:$0xff]
      %v508 = vld [vmem:[%s2 + $0x260] sm:$0xff]
      %v509 = vld [vmem:[%s2 + $0x268] sm:$0xff]
      %v510 = vld [vmem:[%s2 + $0x270] sm:$0xff]
      %v511 = vld [vmem:[%s2 + $0x278] sm:$0xff]
      %v512 = vld [vmem:[%s2 + $0x280] sm:$0xff]
      %v513 = vld [vmem:[%s2 + $0x288] sm:$0xff]
      %v514 = vld [vmem:[%s2 + $0x290] sm:$0xff]
      %v515 = vld [vmem:[%s2 + $0x298] sm:$0xff]
      %v516 = vld [vmem:[%s2 + $0x2a0] sm:$0xff]
      %v517 = vld [vmem:[%s2 + $0x2a8] sm:$0xff]
      %v518 = vld [vmem:[%s2 + $0x2b0] sm:$0xff]
      %v519 = vld [vmem:[%s2 + $0x2b8] sm:$0xff]
      %v520 = vld [vmem:[%s2 + $0x2c0] sm:$0xff]
      %v521 = vld [vmem:[%s2 + $0x2c8] sm:$0xff]
      %v522 = vld [vmem:[%s2 + $0x2d0] sm:$0xff]
      %v523 = vld [vmem:[%s2 + $0x2d8] sm:$0xff]
      %v524 = vld [vmem:[%s2 + $0x2e0] sm:$0xff]
      %v525 = vld [vmem:[%s2 + $0x2e8] sm:$0xff]
      %v526 = vld [vmem:[%s2 + $0x2f0] sm:$0xff]
      %v527 = vld [vmem:[%s2 + $0x2f8] sm:$0xff]
      %v528 = vld [vmem:[%s2 + $0x300] sm:$0xff]
      %v529 = vld [vmem:[%s2 + $0x308] sm:$0xff]
      %v530 = vld [vmem:[%s2 + $0x310] sm:$0xff]
      %v531 = vld [vmem:[%s2 + $0x318] sm:$0xff]
      %v532 = vld [vmem:[%s2 + $0x320] sm:$0xff]
      %v533 = vld [vmem:[%s2 + $0x328] sm:$0xff]
      %v534 = vld [vmem:[%s2 + $0x330] sm:$0xff]
      %v535 = vld [vmem:[%s2 + $0x338] sm:$0xff]
      %v536 = vld [vmem:[%s2 + $0x340] sm:$0xff]
      %v537 = vld [vmem:[%s2 + $0x348] sm:$0xff]
      %v538 = vld [vmem:[%s2 + $0x350] sm:$0xff]
      %v539 = vld [vmem:[%s2 + $0x358] sm:$0xff]
      %v540 = vld [vmem:[%s2 + $0x360] sm:$0xff]
      %v541 = vld [vmem:[%s2 + $0x368] sm:$0xff]
      %v542 = vld [vmem:[%s2 + $0x370] sm:$0xff]
      %v543 = vld [vmem:[%s2 + $0x378] sm:$0xff]
      %v544 = vld [vmem:[%s2 + $0x380] sm:$0xff]
      %v545 = vld [vmem:[%s2 + $0x388] sm:$0xff]
      %v546 = vld [vmem:[%s2 + $0x390] sm:$0xff]
      %v547 = vld [vmem:[%s2 + $0x398] sm:$0xff]
      %v548 = vld [vmem:[%s2 + $0x3a0] sm:$0xff]
      %v549 = vld [vmem:[%s2 + $0x3a8] sm:$0xff]
      %v550 = vld [vmem:[%s2 + $0x3b0] sm:$0xff]
      %v551 = vld [vmem:[%s2 + $0x3b8] sm:$0xff]
      %v552 = vld [vmem:[%s2 + $0x3c0] sm:$0xff]
      %v553 = vld [vmem:[%s2 + $0x3c8] sm:$0xff]
      %v554 = vld [vmem:[%s2 + $0x3d0] sm:$0xff]
      %v555 = vld [vmem:[%s2 + $0x3d8] sm:$0xff]
      %v556 = vld [vmem:[%s2 + $0x3e0] sm:$0xff]
      %v557 = vld [vmem:[%s2 + $0x3e8] sm:$0xff]
      %v558 = vld [vmem:[%s2 + $0x3f0] sm:$0xff]
      %v559 = vld [vmem:[%s2 + $0x3f8] sm:$0xff]
      %v560 = vld [vmem:[%s2 + $0x400] sm:$0xff]
      %v561 = vld [vmem:[%s2 + $0x408] sm:$0xff]
      %v562 = vld [vmem:[%s2 + $0x410] sm:$0xff]
      %v563 = vld [vmem:[%s2 + $0x418] sm:$0xff]
      %v564 = vld [vmem:[%s2 + $0x420] sm:$0xff]
      %v565 = vld [vmem:[%s2 + $0x428] sm:$0xff]
      %v566 = vld [vmem:[%s2 + $0x430] sm:$0xff]
      %v567 = vld [vmem:[%s2 + $0x438] sm:$0xff]
      %v568 = vld [vmem:[%s2 + $0x440] sm:$0xff]
      %v569 = vld [vmem:[%s2 + $0x448] sm:$0xff]
      %v570 = vld [vmem:[%s2 + $0x450] sm:$0xff]
      %v571 = vld [vmem:[%s2 + $0x458] sm:$0xff]
      %v572 = vld [vmem:[%s2 + $0x460] sm:$0xff]
      %v573 = vld [vmem:[%s2 + $0x468] sm:$0xff]
      %v574 = vld [vmem:[%s2 + $0x470] sm:$0xff]
      %v575 = vld [vmem:[%s2 + $0x478] sm:$0xff]
      %v576 = vld [vmem:[%s2 + $0x480] sm:$0xff]
      %v577 = vld [vmem:[%s2 + $0x488] sm:$0xff]
      %v578 = vld [vmem:[%s2 + $0x490] sm:$0xff]
      %v579 = vld [vmem:[%s2 + $0x498] sm:$0xff]
      %v580 = vld [vmem:[%s2 + $0x4a0] sm:$0xff]
      %v581 = vld [vmem:[%s2 + $0x4a8] sm:$0xff]
      %v582 = vld [vmem:[%s2 + $0x4b0] sm:$0xff]
      %v583 = vld [vmem:[%s2 + $0x4b8] sm:$0xff]
      %v584 = vld [vmem:[%s2 + $0x4c0] sm:$0xff]
      %v585 = vld [vmem:[%s2 + $0x4c8] sm:$0xff]
      %v586 = vld [vmem:[%s2 + $0x4d0] sm:$0xff]
      %v587 = vld [vmem:[%s2 + $0x4d8] sm:$0xff]
      %v588 = vld [vmem:[%s2 + $0x4e0] sm:$0xff]
      %v589 = vld [vmem:[%s2 + $0x4e8] sm:$0xff]
      %v590 = vld [vmem:[%s2 + $0x4f0] sm:$0xff]
      %v591 = vld [vmem:[%s2 + $0x4f8] sm:$0xff]
      %v592 = vld [vmem:[%s2 + $0x500] sm:$0xff]
      %v593 = vld [vmem:[%s2 + $0x508] sm:$0xff]
      %v594 = vld [vmem:[%s2 + $0x510] sm:$0xff]
      %v595 = vld [vmem:[%s2 + $0x518] sm:$0xff]
      %v596 = vld [vmem:[%s2 + $0x520] sm:$0xff]
      %v597 = vld [vmem:[%s2 + $0x528] sm:$0xff]
      %v598 = vld [vmem:[%s2 + $0x530] sm:$0xff]
      %v599 = vld [vmem:[%s2 + $0x538] sm:$0xff]
      %v600 = vld [vmem:[%s2 + $0x540] sm:$0xff]
      %v601 = vld [vmem:[%s2 + $0x548] sm:$0xff]
      %v602 = vld [vmem:[%s2 + $0x550] sm:$0xff]
      %v603 = vld [vmem:[%s2 + $0x558] sm:$0xff]
      %v604 = vld [vmem:[%s2 + $0x560] sm:$0xff]
      %v605 = vld [vmem:[%s2 + $0x568] sm:$0xff]
      %v606 = vld [vmem:[%s2 + $0x570] sm:$0xff]
      %v607 = vld [vmem:[%s2 + $0x578] sm:$0xff]
      %v608 = vld [vmem:[%s2 + $0x580] sm:$0xff]
      %v609 = vld [vmem:[%s2 + $0x588] sm:$0xff]
      %v610 = vld [vmem:[%s2 + $0x590] sm:$0xff]
      %v611 = vld [vmem:[%s2 + $0x598] sm:$0xff]
      %v612 = vld [vmem:[%s2 + $0x5a0] sm:$0xff]
      %v613 = vld [vmem:[%s2 + $0x5a8] sm:$0xff]
      %v614 = vld [vmem:[%s2 + $0x5b0] sm:$0xff]
      %v615 = vld [vmem:[%s2 + $0x5b8] sm:$0xff]
      %v616 = vld [vmem:[%s2 + $0x5c0] sm:$0xff]
      %v617 = vld [vmem:[%s2 + $0x5c8] sm:$0xff]
      %v618 = vld [vmem:[%s2 + $0x5d0] sm:$0xff]
      %v619 = vld [vmem:[%s2 + $0x5d8] sm:$0xff]
      %v620 = vld [vmem:[%s2 + $0x5e0] sm:$0xff]
      %v621 = vld [vmem:[%s2 + $0x5e8] sm:$0xff]
      %v622 = vld [vmem:[%s2 + $0x5f0] sm:$0xff]
      %v623 = vld [vmem:[%s2 + $0x5f8] sm:$0xff]
      %v624 = vld [vmem:[%s2 + $0x600] sm:$0xff]
      %v625 = vld [vmem:[%s2 + $0x608] sm:$0xff]
      %v626 = vld [vmem:[%s2 + $0x610] sm:$0xff]
      %v627 = vld [vmem:[%s2 + $0x618] sm:$0xff]
      %v628 = vld [vmem:[%s2 + $0x620] sm:$0xff]
      %v629 = vld [vmem:[%s2 + $0x628] sm:$0xff]
      %v630 = vld [vmem:[%s2 + $0x630] sm:$0xff]
      %v631 = vld [vmem:[%s2 + $0x638] sm:$0xff]
      %v632 = vld [vmem:[%s2 + $0x640] sm:$0xff]
      %v633 = vld [vmem:[%s2 + $0x648] sm:$0xff]
      %v634 = vld [vmem:[%s2 + $0x650] sm:$0xff]
      %v635 = vld [vmem:[%s2 + $0x658] sm:$0xff]
      %v636 = vld [vmem:[%s2 + $0x660] sm:$0xff]
      %v637 = vld [vmem:[%s2 + $0x668] sm:$0xff]
      %v638 = vld [vmem:[%s2 + $0x670] sm:$0xff]
      %v639 = vld [vmem:[%s2 + $0x678] sm:$0xff]
      %v640 = vld [vmem:[%s2 + $0x680] sm:$0xff]
      %v641 = vld [vmem:[%s2 + $0x688] sm:$0xff]
      %v642 = vld [vmem:[%s2 + $0x690] sm:$0xff]
      %v643 = vld [vmem:[%s2 + $0x698] sm:$0xff]
      %v644 = vld [vmem:[%s2 + $0x6a0] sm:$0xff]
      %v645 = vld [vmem:[%s2 + $0x6a8] sm:$0xff]
      %v646 = vld [vmem:[%s2 + $0x6b0] sm:$0xff]
      %v647 = vld [vmem:[%s2 + $0x6b8] sm:$0xff]
      %v648 = vld [vmem:[%s2 + $0x6c0] sm:$0xff]
      %v649 = vld [vmem:[%s2 + $0x6c8] sm:$0xff]
      %v650 = vld [vmem:[%s2 + $0x6d0] sm:$0xff]
      %v651 = vld [vmem:[%s2 + $0x6d8] sm:$0xff]
      %v652 = vld [vmem:[%s2 + $0x6e0] sm:$0xff]
      %v653 = vld [vmem:[%s2 + $0x6e8] sm:$0xff]
      %v654 = vld [vmem:[%s2 + $0x6f0] sm:$0xff]
      %v655 = vld [vmem:[%s2 + $0x6f8] sm:$0xff]
      %v656 = vld [vmem:[%s2 + $0x700] sm:$0xff]
      %v657 = vld [vmem:[%s2 + $0x708] sm:$0xff]
      %v658 = vld [vmem:[%s2 + $0x710] sm:$0xff]
      %v659 = vld [vmem:[%s2 + $0x718] sm:$0xff]
      %v660 = vld [vmem:[%s2 + $0x720] sm:$0xff]
      %v661 = vld [vmem:[%s2 + $0x728] sm:$0xff]
      %v662 = vld [vmem:[%s2 + $0x730] sm:$0xff]
      %v663 = vld [vmem:[%s2 + $0x738] sm:$0xff]
      %v664 = vld [vmem:[%s2 + $0x740] sm:$0xff]
      %v665 = vld [vmem:[%s2 + $0x748] sm:$0xff]
      %v666 = vld [vmem:[%s2 + $0x750] sm:$0xff]
      %v667 = vld [vmem:[%s2 + $0x758] sm:$0xff]
      %v668 = vld [vmem:[%s2 + $0x760] sm:$0xff]
      %v669 = vld [vmem:[%s2 + $0x768] sm:$0xff]
      %v670 = vld [vmem:[%s2 + $0x770] sm:$0xff]
      %v671 = vld [vmem:[%s2 + $0x778] sm:$0xff]
      %v672 = vld [vmem:[%s2 + $0x780] sm:$0xff]
      %v673 = vld [vmem:[%s2 + $0x788] sm:$0xff]
      %v674 = vld [vmem:[%s2 + $0x790] sm:$0xff]
      %v675 = vld [vmem:[%s2 + $0x798] sm:$0xff]
      %v676 = vld [vmem:[%s2 + $0x7a0] sm:$0xff]
      %v677 = vld [vmem:[%s2 + $0x7a8] sm:$0xff]
      %v678 = vld [vmem:[%s2 + $0x7b0] sm:$0xff]
      %v679 = vld [vmem:[%s2 + $0x7b8] sm:$0xff]
      %v680 = vld [vmem:[%s2 + $0x7c0] sm:$0xff]
      %v681 = vld [vmem:[%s2 + $0x7c8] sm:$0xff]
      %v682 = vld [vmem:[%s2 + $0x7d0] sm:$0xff]
      %v683 = vld [vmem:[%s2 + $0x7d8] sm:$0xff]
      %v684 = vld [vmem:[%s2 + $0x7e0] sm:$0xff]
      %v685 = vld [vmem:[%s2 + $0x7e8] sm:$0xff]
      %v686 = vld [vmem:[%s2 + $0x7f0] sm:$0xff]
      %v687 = vld [vmem:[%s2 + $0x7f8] sm:$0xff]
      %v688 = vld [vmem:[%s2 + $0x800] sm:$0xff]
      %v689 = vld [vmem:[%s2 + $0x808] sm:$0xff]
      %v690 = vld [vmem:[%s2 + $0x810] sm:$0xff]
      %v691 = vld [vmem:[%s2 + $0x818] sm:$0xff]
      %v692 = vld [vmem:[%s2 + $0x820] sm:$0xff]
      %v693 = vld [vmem:[%s2 + $0x828] sm:$0xff]
      %v694 = vld [vmem:[%s2 + $0x830] sm:$0xff]
      %v695 = vld [vmem:[%s2 + $0x838] sm:$0xff]
      %v696 = vld [vmem:[%s2 + $0x840] sm:$0xff]
      %v697 = vld [vmem:[%s2 + $0x848] sm:$0xff]
      %v698 = vld [vmem:[%s2 + $0x850] sm:$0xff]
      %v699 = vld [vmem:[%s2 + $0x858] sm:$0xff]
      %v700 = vld [vmem:[%s2 + $0x860] sm:$0xff]
      %v701 = vld [vmem:[%s2 + $0x868] sm:$0xff]
      %v702 = vld [vmem:[%s2 + $0x870] sm:$0xff]
      %v703 = vld [vmem:[%s2 + $0x878] sm:$0xff]
      %v704 = vld [vmem:[%s2 + $0x880] sm:$0xff]
      %v705 = vld [vmem:[%s2 + $0x888] sm:$0xff]
      %v706 = vld [vmem:[%s2 + $0x890] sm:$0xff]
      %v707 = vld [vmem:[%s2 + $0x898] sm:$0xff]
      %v708 = vld [vmem:[%s2 + $0x8a0] sm:$0xff]
      %v709 = vld [vmem:[%s2 + $0x8a8] sm:$0xff]
      %v710 = vld [vmem:[%s2 + $0x8b0] sm:$0xff]
      %v711 = vld [vmem:[%s2 + $0x8b8] sm:$0xff]
      %v712 = vld [vmem:[%s2 + $0x8c0] sm:$0xff]
      %v713 = vld [vmem:[%s2 + $0x8c8] sm:$0xff]
      %v714 = vld [vmem:[%s2 + $0x8d0] sm:$0xff]
      %v715 = vld [vmem:[%s2 + $0x8d8] sm:$0xff]
      %v716 = vld [vmem:[%s2 + $0x8e0] sm:$0xff]
      %v717 = vld [vmem:[%s2 + $0x8e8] sm:$0xff]
      %v718 = vld [vmem:[%s2 + $0x8f0] sm:$0xff]
      %v719 = vld [vmem:[%s2 + $0x8f8] sm:$0xff]
      %v720 = vld [vmem:[%s2 + $0x900] sm:$0xff]
      %v721 = vld [vmem:[%s2 + $0x908] sm:$0xff]
      %v722 = vld [vmem:[%s2 + $0x910] sm:$0xff]
      %v723 = vld [vmem:[%s2 + $0x918] sm:$0xff]
      %v724 = vld [vmem:[%s2 + $0x920] sm:$0xff]
      %v725 = vld [vmem:[%s2 + $0x928] sm:$0xff]
      %v726 = vld [vmem:[%s2 + $0x930] sm:$0xff]
      %v727 = vld [vmem:[%s2 + $0x938] sm:$0xff]
      %v728 = vld [vmem:[%s2 + $0x940] sm:$0xff]
      %v729 = vld [vmem:[%s2 + $0x948] sm:$0xff]
      %v730 = vld [vmem:[%s2 + $0x950] sm:$0xff]
      %v731 = vld [vmem:[%s2 + $0x958] sm:$0xff]
      %v732 = vld [vmem:[%s2 + $0x960] sm:$0xff]
      %v733 = vld [vmem:[%s2 + $0x968] sm:$0xff]
      %v734 = vld [vmem:[%s2 + $0x970] sm:$0xff]
      %v735 = vld [vmem:[%s2 + $0x978] sm:$0xff]
      %v736 = vld [vmem:[%s2 + $0x980] sm:$0xff]
      %v737 = vld [vmem:[%s2 + $0x988] sm:$0xff]
      %v738 = vld [vmem:[%s2 + $0x990] sm:$0xff]
      %v739 = vld [vmem:[%s2 + $0x998] sm:$0xff]
      %v740 = vld [vmem:[%s2 + $0x9a0] sm:$0xff]
      %v741 = vld [vmem:[%s2 + $0x9a8] sm:$0xff]
      %v742 = vld [vmem:[%s2 + $0x9b0] sm:$0xff]
      %v743 = vld [vmem:[%s2 + $0x9b8] sm:$0xff]
      %v744 = vld [vmem:[%s2 + $0x9c0] sm:$0xff]
      %v745 = vld [vmem:[%s2 + $0x9c8] sm:$0xff]
      %v746 = vld [vmem:[%s2 + $0x9d0] sm:$0xff]
      %v747 = vld [vmem:[%s2 + $0x9d8] sm:$0xff]
      %v748 = vld [vmem:[%s2 + $0x9e0] sm:$0xff]
      %v749 = vld [vmem:[%s2 + $0x9e8] sm:$0xff]
      %v750 = vld [vmem:[%s2 + $0x9f0] sm:$0xff]
      %v751 = vld [vmem:[%s2 + $0x9f8] sm:$0xff]
      %v752 = vld [vmem:[%s2 + $0xa00] sm:$0xff]
      %v753 = vld [vmem:[%s2 + $0xa08] sm:$0xff]
      %v754 = vld [vmem:[%s2 + $0xa10] sm:$0xff]
      %v755 = vld [vmem:[%s2 + $0xa18] sm:$0xff]
      %v756 = vld [vmem:[%s2 + $0xa20] sm:$0xff]
      %v757 = vld [vmem:[%s2 + $0xa28] sm:$0xff]
      %v758 = vld [vmem:[%s2 + $0xa30] sm:$0xff]
      %v759 = vld [vmem:[%s2 + $0xa38] sm:$0xff]
      %v760 = vld [vmem:[%s2 + $0xa40] sm:$0xff]
      %v761 = vld [vmem:[%s2 + $0xa48] sm:$0xff]
      %v762 = vld [vmem:[%s2 + $0xa50] sm:$0xff]
      %v763 = vld [vmem:[%s2 + $0xa58] sm:$0xff]
      %v764 = vld [vmem:[%s2 + $0xa60] sm:$0xff]
      %v765 = vld [vmem:[%s2 + $0xa68] sm:$0xff]
      %v766 = vld [vmem:[%s2 + $0xa70] sm:$0xff]
      %v767 = vld [vmem:[%s2 + $0xa78] sm:$0xff]
      %v768 = vld [vmem:[%s2 + $0xa80] sm:$0xff]
      %v769 = vld [vmem:[%s2 + $0xa88] sm:$0xff]
      %v770 = vld [vmem:[%s2 + $0xa90] sm:$0xff]
      %v771 = vld [vmem:[%s2 + $0xa98] sm:$0xff]
      %v772 = vld [vmem:[%s2 + $0xaa0] sm:$0xff]
      %v773 = vld [vmem:[%s2 + $0xaa8] sm:$0xff]
      %v774 = vld [vmem:[%s2 + $0xab0] sm:$0xff]
      %v775 = vld [vmem:[%s2 + $0xab8] sm:$0xff]
      %v776 = vld [vmem:[%s2 + $0xac0] sm:$0xff]
      %v777 = vld [vmem:[%s2 + $0xac8] sm:$0xff]
      %v778 = vld [vmem:[%s2 + $0xad0] sm:$0xff]
      %v779 = vld [vmem:[%s2 + $0xad8] sm:$0xff]
      %v780 = vld [vmem:[%s2 + $0xae0] sm:$0xff]
      %v781 = vld [vmem:[%s2 + $0xae8] sm:$0xff]
      %v782 = vld [vmem:[%s2 + $0xaf0] sm:$0xff]
      %v783 = vld [vmem:[%s2 + $0xaf8] sm:$0xff]
      %v784 = vld [vmem:[%s2 + $0xb00] sm:$0xff]
      %v785 = vld [vmem:[%s2 + $0xb08] sm:$0xff]
      %v786 = vld [vmem:[%s2 + $0xb10] sm:$0xff]
      %v787 = vld [vmem:[%s2 + $0xb18] sm:$0xff]
      %v788 = vld [vmem:[%s2 + $0xb20] sm:$0xff]
      %v789 = vld [vmem:[%s2 + $0xb28] sm:$0xff]
      %v790 = vld [vmem:[%s2 + $0xb30] sm:$0xff]
      %v791 = vld [vmem:[%s2 + $0xb38] sm:$0xff]
      %v792 = vld [vmem:[%s2 + $0xb40] sm:$0xff]
      %v793 = vld [vmem:[%s2 + $0xb48] sm:$0xff]
      %v794 = vld [vmem:[%s2 + $0xb50] sm:$0xff]
      %v795 = vld [vmem:[%s2 + $0xb58] sm:$0xff]
      %v796 = vld [vmem:[%s2 + $0xb60] sm:$0xff]
      %v797 = vld [vmem:[%s2 + $0xb68] sm:$0xff]
      %v798 = vld [vmem:[%s2 + $0xb70] sm:$0xff]
      %v799 = vld [vmem:[%s2 + $0xb78] sm:$0xff]
      %v800 = vld [vmem:[%s2 + $0xb80] sm:$0xff]
      %v801 = vld [vmem:[%s2 + $0xb88] sm:$0xff]
      %v802 = vld [vmem:[%s2 + $0xb90] sm:$0xff]
      %v803 = vld [vmem:[%s2 + $0xb98] sm:$0xff]
      %v804 = vld [vmem:[%s2 + $0xba0] sm:$0xff]
      %v805 = vld [vmem:[%s2 + $0xba8] sm:$0xff]
      %v806 = vld [vmem:[%s2 + $0xbb0] sm:$0xff]
      %v807 = vld [vmem:[%s2 + $0xbb8] sm:$0xff]
      %v808 = vld [vmem:[%s2 + $0xbc0] sm:$0xff]
      %v809 = vld [vmem:[%s2 + $0xbc8] sm:$0xff]
      %v810 = vld [vmem:[%s2 + $0xbd0] sm:$0xff]
      %v811 = vld [vmem:[%s2 + $0xbd8] sm:$0xff]
      %v812 = vld [vmem:[%s2 + $0xbe0] sm:$0xff]
      %v813 = vld [vmem:[%s2 + $0xbe8] sm:$0xff]
      %v814 = vld [vmem:[%s2 + $0xbf0] sm:$0xff]
      %v815 = vld [vmem:[%s2 + $0xbf8] sm:$0xff]
      %v816 = vld [vmem:[%s2 + $0xc00] sm:$0xff]
      %v817 = vld [vmem:[%s2 + $0xc08] sm:$0xff]
      %v818 = vld [vmem:[%s2 + $0xc10] sm:$0xff]
      %v819 = vld [vmem:[%s2 + $0xc18] sm:$0xff]
      %v820 = vld [vmem:[%s2 + $0xc20] sm:$0xff]
      %v821 = vld [vmem:[%s2 + $0xc28] sm:$0xff]
      %v822 = vld [vmem:[%s2 + $0xc30] sm:$0xff]
      %v823 = vld [vmem:[%s2 + $0xc38] sm:$0xff]
      %v824 = vld [vmem:[%s2 + $0xc40] sm:$0xff]
      %v825 = vld [vmem:[%s2 + $0xc48] sm:$0xff]
      %v826 = vld [vmem:[%s2 + $0xc50] sm:$0xff]
      %v827 = vld [vmem:[%s2 + $0xc58] sm:$0xff]
      %v828 = vld [vmem:[%s2 + $0xc60] sm:$0xff]
      %v829 = vld [vmem:[%s2 + $0xc68] sm:$0xff]
      %v830 = vld [vmem:[%s2 + $0xc70] sm:$0xff]
      %v831 = vld [vmem:[%s2 + $0xc78] sm:$0xff]
      %v832 = vld [vmem:[%s2 + $0xc80] sm:$0xff]
      %v833 = vld [vmem:[%s2 + $0xc88] sm:$0xff]
      %v834 = vld [vmem:[%s2 + $0xc90] sm:$0xff]
      %v835 = vld [vmem:[%s2 + $0xc98] sm:$0xff]
      %v836 = vld [vmem:[%s2 + $0xca0] sm:$0xff]
      %v837 = vld [vmem:[%s2 + $0xca8] sm:$0xff]
      %v838 = vld [vmem:[%s2 + $0xcb0] sm:$0xff]
      %v839 = vld [vmem:[%s2 + $0xcb8] sm:$0xff]
      %v840 = vld [vmem:[%s2 + $0xcc0] sm:$0xff]
      %v841 = vld [vmem:[%s2 + $0xcc8] sm:$0xff]
      %v842 = vld [vmem:[%s2 + $0xcd0] sm:$0xff]
      %v843 = vld [vmem:[%s2 + $0xcd8] sm:$0xff]
      %v844 = vld [vmem:[%s2 + $0xce0] sm:$0xff]
      %v845 = vld [vmem:[%s2 + $0xce8] sm:$0xff]
      %v846 = vld [vmem:[%s2 + $0xcf0] sm:$0xff]
      %v847 = vld [vmem:[%s2 + $0xcf8] sm:$0xff]
      %v848 = vld [vmem:[%s2 + $0xd00] sm:$0xff]
      %v849 = vld [vmem:[%s2 + $0xd08] sm:$0xff]
      %v850 = vld [vmem:[%s2 + $0xd10] sm:$0xff]
      %v851 = vld [vmem:[%s2 + $0xd18] sm:$0xff]
      %v852 = vld [vmem:[%s2 + $0xd20] sm:$0xff]
      %v853 = vld [vmem:[%s2 + $0xd28] sm:$0xff]
      %v854 = vld [vmem:[%s2 + $0xd30] sm:$0xff]
      %v855 = vld [vmem:[%s2 + $0xd38] sm:$0xff]
      %v856 = vld [vmem:[%s2 + $0xd40] sm:$0xff]
      %v857 = vld [vmem:[%s2 + $0xd48] sm:$0xff]
      %v858 = vld [vmem:[%s2 + $0xd50] sm:$0xff]
      %v859 = vld [vmem:[%s2 + $0xd58] sm:$0xff]
      %v860 = vld [vmem:[%s2 + $0xd60] sm:$0xff]
      %v861 = vld [vmem:[%s2 + $0xd68] sm:$0xff]
      %v862 = vld [vmem:[%s2 + $0xd70] sm:$0xff]
      %v863 = vld [vmem:[%s2 + $0xd78] sm:$0xff]
      %v864 = vld [vmem:[%s2 + $0xd80] sm:$0xff]
      %v865 = vld [vmem:[%s2 + $0xd88] sm:$0xff]
      %v866 = vld [vmem:[%s2 + $0xd90] sm:$0xff]
      %v867 = vld [vmem:[%s2 + $0xd98] sm:$0xff]
      %v868 = vld [vmem:[%s2 + $0xda0] sm:$0xff]
      %v869 = vld [vmem:[%s2 + $0xda8] sm:$0xff]
      %v870 = vld [vmem:[%s2 + $0xdb0] sm:$0xff]
      %v871 = vld [vmem:[%s2 + $0xdb8] sm:$0xff]
      %v872 = vld [vmem:[%s2 + $0xdc0] sm:$0xff]
      %v873 = vld [vmem:[%s2 + $0xdc8] sm:$0xff]
      %v874 = vld [vmem:[%s2 + $0xdd0] sm:$0xff]
      %v875 = vld [vmem:[%s2 + $0xdd8] sm:$0xff]
      %v876 = vld [vmem:[%s2 + $0xde0] sm:$0xff]
      %v877 = vld [vmem:[%s2 + $0xde8] sm:$0xff]
      %v878 = vld [vmem:[%s2 + $0xdf0] sm:$0xff]
      %v879 = vld [vmem:[%s2 + $0xdf8] sm:$0xff]
      %v880 = vld [vmem:[%s2 + $0xe00] sm:$0xff]
      %v881 = vld [vmem:[%s2 + $0xe08] sm:$0xff]
      %v882 = vld [vmem:[%s2 + $0xe10] sm:$0xff]
      %v883 = vld [vmem:[%s2 + $0xe18] sm:$0xff]
      %v884 = vld [vmem:[%s2 + $0xe20] sm:$0xff]
      %v885 = vld [vmem:[%s2 + $0xe28] sm:$0xff]
      %v886 = vld [vmem:[%s2 + $0xe30] sm:$0xff]
      %v887 = vld [vmem:[%s2 + $0xe38] sm:$0xff]
      %v888 = vld [vmem:[%s2 + $0xe40] sm:$0xff]
      %v889 = vld [vmem:[%s2 + $0xe48] sm:$0xff]
      %v890 = vld [vmem:[%s2 + $0xe50] sm:$0xff]
      %v891 = vld [vmem:[%s2 + $0xe58] sm:$0xff]
      %v892 = vld [vmem:[%s2 + $0xe60] sm:$0xff]
      %v893 = vld [vmem:[%s2 + $0xe68] sm:$0xff]
      %v894 = vld [vmem:[%s2 + $0xe70] sm:$0xff]
      %v895 = vld [vmem:[%s2 + $0xe78] sm:$0xff]
      %v896 = vld [vmem:[%s2 + $0xe80] sm:$0xff]
      %v897 = vld [vmem:[%s2 + $0xe88] sm:$0xff]
      %v898 = vld [vmem:[%s2 + $0xe90] sm:$0xff]
      %v899 = vld [vmem:[%s2 + $0xe98] sm:$0xff]
      %v900 = vld [vmem:[%s2 + $0xea0] sm:$0xff]
      %v901 = vld [vmem:[%s2 + $0xea8] sm:$0xff]
      %v902 = vld [vmem:[%s2 + $0xeb0] sm:$0xff]
      %v903 = vld [vmem:[%s2 + $0xeb8] sm:$0xff]
      %v904 = vld [vmem:[%s2 + $0xec0] sm:$0xff]
      %v905 = vld [vmem:[%s2 + $0xec8] sm:$0xff]
      %v906 = vld [vmem:[%s2 + $0xed0] sm:$0xff]
      %v907 = vld [vmem:[%s2 + $0xed8] sm:$0xff]
      %v908 = vld [vmem:[%s2 + $0xee0] sm:$0xff]
      %v909 = vld [vmem:[%s2 + $0xee8] sm:$0xff]
      %v910 = vld [vmem:[%s2 + $0xef0] sm:$0xff]
      %v911 = vld [vmem:[%s2 + $0xef8] sm:$0xff]
      %v912 = vld [vmem:[%s2 + $0xf00] sm:$0xff]
      %v913 = vld [vmem:[%s2 + $0xf08] sm:$0xff]
      %v914 = vld [vmem:[%s2 + $0xf10] sm:$0xff]
      %v915 = vld [vmem:[%s2 + $0xf18] sm:$0xff]
      %v916 = vld [vmem:[%s2 + $0xf20] sm:$0xff]
      %v917 = vld [vmem:[%s2 + $0xf28] sm:$0xff]
      %v918 = vld [vmem:[%s2 + $0xf30] sm:$0xff]
      %v919 = vld [vmem:[%s2 + $0xf38] sm:$0xff]
      %v920 = vld [vmem:[%s2 + $0xf40] sm:$0xff]
      %v921 = vld [vmem:[%s2 + $0xf48] sm:$0xff]
      %v922 = vld [vmem:[%s2 + $0xf50] sm:$0xff]
      %v923 = vld [vmem:[%s2 + $0xf58] sm:$0xff]
      %v924 = vld [vmem:[%s2 + $0xf60] sm:$0xff]
      %v925 = vld [vmem:[%s2 + $0xf68] sm:$0xff]
      %v926 = vld [vmem:[%s2 + $0xf70] sm:$0xff]
      %v927 = vld [vmem:[%s2 + $0xf78] sm:$0xff]
      %v928 = vld [vmem:[%s2 + $0xf80] sm:$0xff]
      %v929 = vld [vmem:[%s2 + $0xf88] sm:$0xff]
      %v930 = vld [vmem:[%s2 + $0xf90] sm:$0xff]
      %v931 = vld [vmem:[%s2 + $0xf98] sm:$0xff]
      %v932 = vld [vmem:[%s2 + $0xfa0] sm:$0xff]
      %v933 = vld [vmem:[%s2 + $0xfa8] sm:$0xff]
      %v934 = vld [vmem:[%s2 + $0xfb0] sm:$0xff]
      %v935 = vld [vmem:[%s2 + $0xfb8] sm:$0xff]
      %v936 = vld [vmem:[%s2 + $0xfc0] sm:$0xff]
      %v937 = vld [vmem:[%s2 + $0xfc8] sm:$0xff]
      %v938 = vld [vmem:[%s2 + $0xfd0] sm:$0xff]
      %v939 = vld [vmem:[%s2 + $0xfd8] sm:$0xff]
      %v940 = vld [vmem:[%s2 + $0xfe0] sm:$0xff]
      %v941 = vld [vmem:[%s2 + $0xfe8] sm:$0xff]
      %v942 = vld [vmem:[%s2 + $0xff0] sm:$0xff]
      %v943 = vld [vmem:[%s2 + $0xff8] sm:$0xff]
      %944 = vmatprep.subr.mxu0 %v493
      %945 = vmatpush1.msra.mxu0 %v492
      %946 = vmatprep.subr.mxu0 %v489
      %947 = vmatpush1.msra.mxu0 %v488
      %948 = vmatprep.subr.mxu0 %v485
      %949 = vmatpush1.msra.mxu0 %v484
      %950 = vmatprep.subr.mxu0 %v481
      %951 = vmatpush1.msra.mxu0 %v480
      %952 = vmatprep.subr.mxu0 %v477
      %953 = vmatpush1.msra.mxu0 %v476
      %954 = vmatprep.subr.mxu0 %v473
      %955 = vmatpush1.msra.mxu0 %v472
      %956 = vmatprep.subr.mxu0 %v469
      %957 = vmatpush1.msra.mxu0 %v468
      %958 = vmatprep.subr.mxu0 %v465
      %959 = vmatpush1.msra.mxu0 %v464
      %960 = vmatprep.subr.mxu0 %v461
      %961 = vmatpush1.msra.mxu0 %v460
      %962 = vmatprep.subr.mxu0 %v457
      %963 = vmatpush1.msra.mxu0 %v456
      %964 = vmatprep.subr.mxu0 %v453
      %965 = vmatpush1.msra.mxu0 %v452
      %966 = vmatprep.subr.mxu0 %v449
      %967 = vmatpush1.msra.mxu0 %v448
      %968 = vmatprep.subr.mxu0 %v445
      %969 = vmatpush1.msra.mxu0 %v444
      %970 = vmatprep.subr.mxu0 %v441
      %971 = vmatpush1.msra.mxu0 %v440
      %972 = vmatprep.subr.mxu0 %v437
      %973 = vmatpush1.msra.mxu0 %v436
      %974 = vmatprep.subr.mxu0 %v433
      %975 = vmatpush1.msra.mxu0 %v432
      %976 = vmatprep.subr.mxu0 %v557
      %977 = vmatpush2.msra.mxu0 %v556
      %978 = vmatprep.subr.mxu0 %v553
      %979 = vmatpush2.msra.mxu0 %v552
      %980 = vmatprep.subr.mxu0 %v549
      %981 = vmatpush2.msra.mxu0 %v548
      %982 = vmatprep.subr.mxu0 %v545
      %983 = vmatpush2.msra.mxu0 %v544
      %984 = vmatprep.subr.mxu0 %v541
      %985 = vmatpush2.msra.mxu0 %v540
      %986 = vmatprep.subr.mxu0 %v537
      %987 = vmatpush2.msra.mxu0 %v536
      %988 = vmatprep.subr.mxu0 %v533
      %989 = vmatpush2.msra.mxu0 %v532
      %990 = vmatprep.subr.mxu0 %v529
      %991 = vmatpush2.msra.mxu0 %v528
      %992 = vmatprep.subr.mxu0 %v525
      %993 = vmatpush2.msra.mxu0 %v524
      %994 = vmatprep.subr.mxu0 %v521
      %995 = vmatpush2.msra.mxu0 %v520
      %996 = vmatprep.subr.mxu0 %v517
      %997 = vmatpush2.msra.mxu0 %v516
      %998 = vmatprep.subr.mxu0 %v513
      %999 = vmatpush2.msra.mxu0 %v512
      %1000 = vmatprep.subr.mxu0 %v509
      %1001 = vmatpush2.msra.mxu0 %v508
      %1002 = vmatprep.subr.mxu0 %v505
      %1003 = vmatpush2.msra.mxu0 %v504
      %1004 = vmatprep.subr.mxu0 %v501
      %1005 = vmatpush2.msra.mxu0 %v500
      %1006 = vmatprep.subr.mxu0 %v497
      %1007 = vmatpush2.msra.mxu0 %v496
      %1008 = vmatprep.mubr.f32.mxu0 %v340
      %1009 = vmatmul.mubr.f32.gmra.mxu0 %v338
      %v1010 = vpop.f32.mrf.mxu0
      %v1011 = vadd.f32 0.0, %v1010
      %v1012 = vpop.f32.mrf.mxu0
      %v1013 = vadd.f32 0.0, %v1012
      %1014 = vmatprep.mubr.f32.mxu0 %v346
      %1015 = vmatmul.mubr.f32.gmra.mxu0 %v344
      %v1016 = vpop.f32.mrf.mxu0
      %v1017 = vadd.f32 0.0, %v1016
      %v1018 = vpop.f32.mrf.mxu0
      %v1019 = vadd.f32 0.0, %v1018
      %1020 = vmatprep.mubr.f32.mxu0 %v352
      %1021 = vmatmul.mubr.f32.gmra.mxu0 %v350
      %v1022 = vpop.f32.mrf.mxu0
      %v1023 = vadd.f32 0.0, %v1022
      %v1024 = vpop.f32.mrf.mxu0
      %v1025 = vadd.f32 0.0, %v1024
      %1026 = vmatprep.mubr.f32.mxu0 %v358
      %1027 = vmatmul.mubr.f32.gmra.mxu0 %v356
      %v1028 = vpop.f32.mrf.mxu0
      %v1029 = vadd.f32 0.0, %v1028
      %v1030 = vpop.f32.mrf.mxu0
      %v1031 = vadd.f32 0.0, %v1030
      %1032 = vdwg.mxu0
      %1033 = vmatprep.subr.mxu0 %v621
      %1034 = vmatpush1.msra.mxu0 %v620
      %1035 = vmatprep.subr.mxu0 %v617
      %1036 = vmatpush1.msra.mxu0 %v616
      %1037 = vmatprep.subr.mxu0 %v613
      %1038 = vmatpush1.msra.mxu0 %v612
      %1039 = vmatprep.subr.mxu0 %v609
      %1040 = vmatpush1.msra.mxu0 %v608
      %1041 = vmatprep.subr.mxu0 %v605
      %1042 = vmatpush1.msra.mxu0 %v604
      %1043 = vmatprep.subr.mxu0 %v601
      %1044 = vmatpush1.msra.mxu0 %v600
      %1045 = vmatprep.subr.mxu0 %v597
      %1046 = vmatpush1.msra.mxu0 %v596
      %1047 = vmatprep.subr.mxu0 %v593
      %1048 = vmatpush1.msra.mxu0 %v592
      %1049 = vmatprep.subr.mxu0 %v589
      %1050 = vmatpush1.msra.mxu0 %v588
      %1051 = vmatprep.subr.mxu0 %v585
      %1052 = vmatpush1.msra.mxu0 %v584
      %1053 = vmatprep.subr.mxu0 %v581
      %1054 = vmatpush1.msra.mxu0 %v580
      %1055 = vmatprep.subr.mxu0 %v577
      %1056 = vmatpush1.msra.mxu0 %v576
      %1057 = vmatprep.subr.mxu0 %v573
      %1058 = vmatpush1.msra.mxu0 %v572
      %1059 = vmatprep.subr.mxu0 %v569
      %1060 = vmatpush1.msra.mxu0 %v568
      %1061 = vmatprep.subr.mxu0 %v565
      %1062 = vmatpush1.msra.mxu0 %v564
      %1063 = vmatprep.subr.mxu0 %v561
      %1064 = vmatpush1.msra.mxu0 %v560
      %1065 = vmatprep.subr.mxu0 %v685
      %1066 = vmatpush2.msra.mxu0 %v684
      %1067 = vmatprep.subr.mxu0 %v681
      %1068 = vmatpush2.msra.mxu0 %v680
      %1069 = vmatprep.subr.mxu0 %v677
      %1070 = vmatpush2.msra.mxu0 %v676
      %1071 = vmatprep.subr.mxu0 %v673
      %1072 = vmatpush2.msra.mxu0 %v672
      %1073 = vmatprep.subr.mxu0 %v669
      %1074 = vmatpush2.msra.mxu0 %v668
      %1075 = vmatprep.subr.mxu0 %v665
      %1076 = vmatpush2.msra.mxu0 %v664
      %1077 = vmatprep.subr.mxu0 %v661
      %1078 = vmatpush2.msra.mxu0 %v660
      %1079 = vmatprep.subr.mxu0 %v657
      %1080 = vmatpush2.msra.mxu0 %v656
      %1081 = vmatprep.subr.mxu0 %v653
      %1082 = vmatpush2.msra.mxu0 %v652
      %1083 = vmatprep.subr.mxu0 %v649
      %1084 = vmatpush2.msra.mxu0 %v648
      %1085 = vmatprep.subr.mxu0 %v645
      %1086 = vmatpush2.msra.mxu0 %v644
      %1087 = vmatprep.subr.mxu0 %v641
      %1088 = vmatpush2.msra.mxu0 %v640
      %1089 = vmatprep.subr.mxu0 %v637
      %1090 = vmatpush2.msra.mxu0 %v636
      %1091 = vmatprep.subr.mxu0 %v633
      %1092 = vmatpush2.msra.mxu0 %v632
      %1093 = vmatprep.subr.mxu0 %v629
      %1094 = vmatpush2.msra.mxu0 %v628
      %1095 = vmatprep.subr.mxu0 %v625
      %1096 = vmatpush2.msra.mxu0 %v624
      %1097 = vmatprep.mubr.f32.mxu0 %v364
      %1098 = vmatmul.mubr.f32.gmra.mxu0 %v362
      %v1099 = vpop.f32.mrf.mxu0
      %v1100 = vadd.f32 %v1011, %v1099
      %v1101 = vpop.f32.mrf.mxu0
      %v1102 = vadd.f32 %v1013, %v1101
      %1103 = vmatprep.mubr.f32.mxu0 %v370
      %1104 = vmatmul.mubr.f32.gmra.mxu0 %v368
      %v1105 = vpop.f32.mrf.mxu0
      %v1106 = vadd.f32 %v1017, %v1105
      %v1107 = vpop.f32.mrf.mxu0
      %v1108 = vadd.f32 %v1019, %v1107
      %1109 = vmatprep.mubr.f32.mxu0 %v376
      %1110 = vmatmul.mubr.f32.gmra.mxu0 %v374
      %v1111 = vpop.f32.mrf.mxu0
      %v1112 = vadd.f32 %v1023, %v1111
      %v1113 = vpop.f32.mrf.mxu0
      %v1114 = vadd.f32 %v1025, %v1113
      %1115 = vmatprep.mubr.f32.mxu0 %v382
      %1116 = vmatmul.mubr.f32.gmra.mxu0 %v380
      %v1117 = vpop.f32.mrf.mxu0
      %v1118 = vadd.f32 %v1029, %v1117
      %v1119 = vpop.f32.mrf.mxu0
      %v1120 = vadd.f32 %v1031, %v1119
      %1121 = vdwg.mxu0
      %1122 = vmatprep.subr.mxu0 %v749
      %1123 = vmatpush1.msra.mxu0 %v748
      %1124 = vmatprep.subr.mxu0 %v745
      %1125 = vmatpush1.msra.mxu0 %v744
      %1126 = vmatprep.subr.mxu0 %v741
      %1127 = vmatpush1.msra.mxu0 %v740
      %1128 = vmatprep.subr.mxu0 %v737
      %1129 = vmatpush1.msra.mxu0 %v736
      %1130 = vmatprep.subr.mxu0 %v733
      %1131 = vmatpush1.msra.mxu0 %v732
      %1132 = vmatprep.subr.mxu0 %v729
      %1133 = vmatpush1.msra.mxu0 %v728
      %1134 = vmatprep.subr.mxu0 %v725
      %1135 = vmatpush1.msra.mxu0 %v724
      %1136 = vmatprep.subr.mxu0 %v721
      %1137 = vmatpush1.msra.mxu0 %v720
      %1138 = vmatprep.subr.mxu0 %v717
      %1139 = vmatpush1.msra.mxu0 %v716
      %1140 = vmatprep.subr.mxu0 %v713
      %1141 = vmatpush1.msra.mxu0 %v712
      %1142 = vmatprep.subr.mxu0 %v709
      %1143 = vmatpush1.msra.mxu0 %v708
      %1144 = vmatprep.subr.mxu0 %v705
      %1145 = vmatpush1.msra.mxu0 %v704
      %1146 = vmatprep.subr.mxu0 %v701
      %1147 = vmatpush1.msra.mxu0 %v700
      %1148 = vmatprep.subr.mxu0 %v697
      %1149 = vmatpush1.msra.mxu0 %v696
      %1150 = vmatprep.subr.mxu0 %v693
      %1151 = vmatpush1.msra.mxu0 %v692
      %1152 = vmatprep.subr.mxu0 %v689
      %1153 = vmatpush1.msra.mxu0 %v688
      %1154 = vmatprep.subr.mxu0 %v813
      %1155 = vmatpush2.msra.mxu0 %v812
      %1156 = vmatprep.subr.mxu0 %v809
      %1157 = vmatpush2.msra.mxu0 %v808
      %1158 = vmatprep.subr.mxu0 %v805
      %1159 = vmatpush2.msra.mxu0 %v804
      %1160 = vmatprep.subr.mxu0 %v801
      %1161 = vmatpush2.msra.mxu0 %v800
      %1162 = vmatprep.subr.mxu0 %v797
      %1163 = vmatpush2.msra.mxu0 %v796
      %1164 = vmatprep.subr.mxu0 %v793
      %1165 = vmatpush2.msra.mxu0 %v792
      %1166 = vmatprep.subr.mxu0 %v789
      %1167 = vmatpush2.msra.mxu0 %v788
      %1168 = vmatprep.subr.mxu0 %v785
      %1169 = vmatpush2.msra.mxu0 %v784
      %1170 = vmatprep.subr.mxu0 %v781
      %1171 = vmatpush2.msra.mxu0 %v780
      %1172 = vmatprep.subr.mxu0 %v777
      %1173 = vmatpush2.msra.mxu0 %v776
      %1174 = vmatprep.subr.mxu0 %v773
      %1175 = vmatpush2.msra.mxu0 %v772
      %1176 = vmatprep.subr.mxu0 %v769
      %1177 = vmatpush2.msra.mxu0 %v768
      %1178 = vmatprep.subr.mxu0 %v765
      %1179 = vmatpush2.msra.mxu0 %v764
      %1180 = vmatprep.subr.mxu0 %v761
      %1181 = vmatpush2.msra.mxu0 %v760
      %1182 = vmatprep.subr.mxu0 %v757
      %1183 = vmatpush2.msra.mxu0 %v756
      %1184 = vmatprep.subr.mxu0 %v753
      %1185 = vmatpush2.msra.mxu0 %v752
      %1186 = vmatprep.mubr.f32.mxu0 %v388
      %1187 = vmatmul.mubr.f32.gmra.mxu0 %v386
      %v1188 = vpop.f32.mrf.mxu0
      %v1189 = vadd.f32 %v1100, %v1188
      %v1190 = vpop.f32.mrf.mxu0
      %v1191 = vadd.f32 %v1102, %v1190
      %1192 = vmatprep.mubr.f32.mxu0 %v394
      %1193 = vmatmul.mubr.f32.gmra.mxu0 %v392
      %v1194 = vpop.f32.mrf.mxu0
      %v1195 = vadd.f32 %v1106, %v1194
      %v1196 = vpop.f32.mrf.mxu0
      %v1197 = vadd.f32 %v1108, %v1196
      %1198 = vmatprep.mubr.f32.mxu0 %v400
      %1199 = vmatmul.mubr.f32.gmra.mxu0 %v398
      %v1200 = vpop.f32.mrf.mxu0
      %v1201 = vadd.f32 %v1112, %v1200
      %v1202 = vpop.f32.mrf.mxu0
      %v1203 = vadd.f32 %v1114, %v1202
      %1204 = vmatprep.mubr.f32.mxu0 %v406
      %1205 = vmatmul.mubr.f32.gmra.mxu0 %v404
      %v1206 = vpop.f32.mrf.mxu0
      %v1207 = vadd.f32 %v1118, %v1206
      %v1208 = vpop.f32.mrf.mxu0
      %v1209 = vadd.f32 %v1120, %v1208
      %1210 = vdwg.mxu0
      %1211 = vmatprep.subr.mxu0 %v877
      %1212 = vmatpush1.msra.mxu0 %v876
      %1213 = vmatprep.subr.mxu0 %v873
      %1214 = vmatpush1.msra.mxu0 %v872
      %1215 = vmatprep.subr.mxu0 %v869
      %1216 = vmatpush1.msra.mxu0 %v868
      %1217 = vmatprep.subr.mxu0 %v865
      %1218 = vmatpush1.msra.mxu0 %v864
      %1219 = vmatprep.subr.mxu0 %v861
      %1220 = vmatpush1.msra.mxu0 %v860
      %1221 = vmatprep.subr.mxu0 %v857
      %1222 = vmatpush1.msra.mxu0 %v856
      %1223 = vmatprep.subr.mxu0 %v853
      %1224 = vmatpush1.msra.mxu0 %v852
      %1225 = vmatprep.subr.mxu0 %v849
      %1226 = vmatpush1.msra.mxu0 %v848
      %1227 = vmatprep.subr.mxu0 %v845
      %1228 = vmatpush1.msra.mxu0 %v844
      %1229 = vmatprep.subr.mxu0 %v841
      %1230 = vmatpush1.msra.mxu0 %v840
      %1231 = vmatprep.subr.mxu0 %v837
      %1232 = vmatpush1.msra.mxu0 %v836
      %1233 = vmatprep.subr.mxu0 %v833
      %1234 = vmatpush1.msra.mxu0 %v832
      %1235 = vmatprep.subr.mxu0 %v829
      %1236 = vmatpush1.msra.mxu0 %v828
      %1237 = vmatprep.subr.mxu0 %v825
      %1238 = vmatpush1.msra.mxu0 %v824
      %1239 = vmatprep.subr.mxu0 %v821
      %1240 = vmatpush1.msra.mxu0 %v820
      %1241 = vmatprep.subr.mxu0 %v817
      %1242 = vmatpush1.msra.mxu0 %v816
      %1243 = vmatprep.subr.mxu0 %v941
      %1244 = vmatpush2.msra.mxu0 %v940
      %1245 = vmatprep.subr.mxu0 %v937
      %1246 = vmatpush2.msra.mxu0 %v936
      %1247 = vmatprep.subr.mxu0 %v933
      %1248 = vmatpush2.msra.mxu0 %v932
      %1249 = vmatprep.subr.mxu0 %v929
      %1250 = vmatpush2.msra.mxu0 %v928
      %1251 = vmatprep.subr.mxu0 %v925
      %1252 = vmatpush2.msra.mxu0 %v924
      %1253 = vmatprep.subr.mxu0 %v921
      %1254 = vmatpush2.msra.mxu0 %v920
      %1255 = vmatprep.subr.mxu0 %v917
      %1256 = vmatpush2.msra.mxu0 %v916
      %1257 = vmatprep.subr.mxu0 %v913
      %1258 = vmatpush2.msra.mxu0 %v912
      %1259 = vmatprep.subr.mxu0 %v909
      %1260 = vmatpush2.msra.mxu0 %v908
      %1261 = vmatprep.subr.mxu0 %v905
      %1262 = vmatpush2.msra.mxu0 %v904
      %1263 = vmatprep.subr.mxu0 %v901
      %1264 = vmatpush2.msra.mxu0 %v900
      %1265 = vmatprep.subr.mxu0 %v897
      %1266 = vmatpush2.msra.mxu0 %v896
      %1267 = vmatprep.subr.mxu0 %v893
      %1268 = vmatpush2.msra.mxu0 %v892
      %1269 = vmatprep.subr.mxu0 %v889
      %1270 = vmatpush2.msra.mxu0 %v888
      %1271 = vmatprep.subr.mxu0 %v885
      %1272 = vmatpush2.msra.mxu0 %v884
      %1273 = vmatprep.subr.mxu0 %v881
      %1274 = vmatpush2.msra.mxu0 %v880
      %1275 = vmatprep.mubr.f32.mxu0 %v412
      %1276 = vmatmul.mubr.f32.gmra.mxu0 %v410
      %v1277 = vpop.f32.mrf.mxu0
      %v1278 = vadd.f32 %v1189, %v1277
      %v1279 = vpop.f32.mrf.mxu0
      %v1280 = vadd.f32 %v1191, %v1279
      %1281 = vmatprep.mubr.f32.mxu0 %v418
      %1282 = vmatmul.mubr.f32.gmra.mxu0 %v416
      %v1283 = vpop.f32.mrf.mxu0
      %v1284 = vadd.f32 %v1195, %v1283
      %v1285 = vpop.f32.mrf.mxu0
      %v1286 = vadd.f32 %v1197, %v1285
      %1287 = vmatprep.mubr.f32.mxu0 %v424
      %1288 = vmatmul.mubr.f32.gmra.mxu0 %v422
      %v1289 = vpop.f32.mrf.mxu0
      %v1290 = vadd.f32 %v1201, %v1289
      %v1291 = vpop.f32.mrf.mxu0
      %v1292 = vadd.f32 %v1203, %v1291
      %1293 = vmatprep.mubr.f32.mxu0 %v430
      %1294 = vmatmul.mubr.f32.gmra.mxu0 %v428
      %v1295 = vpop.f32.mrf.mxu0
      %v1296 = vadd.f32 %v1207, %v1295
      %v1297 = vpop.f32.mrf.mxu0
      %v1298 = vadd.f32 %v1209, %v1297
      %1299 = vdwg.mxu0
      %1300 = vmatprep.subr.mxu0 %v495
      %1301 = vmatpush1.msra.mxu0 %v494
      %1302 = vmatprep.subr.mxu0 %v491
      %1303 = vmatpush1.msra.mxu0 %v490
      %1304 = vmatprep.subr.mxu0 %v487
      %1305 = vmatpush1.msra.mxu0 %v486
      %1306 = vmatprep.subr.mxu0 %v483
      %1307 = vmatpush1.msra.mxu0 %v482
      %1308 = vmatprep.subr.mxu0 %v479
      %1309 = vmatpush1.msra.mxu0 %v478
      %1310 = vmatprep.subr.mxu0 %v475
      %1311 = vmatpush1.msra.mxu0 %v474
      %1312 = vmatprep.subr.mxu0 %v471
      %1313 = vmatpush1.msra.mxu0 %v470
      %1314 = vmatprep.subr.mxu0 %v467
      %1315 = vmatpush1.msra.mxu0 %v466
      %1316 = vmatprep.subr.mxu0 %v463
      %1317 = vmatpush1.msra.mxu0 %v462
      %1318 = vmatprep.subr.mxu0 %v459
      %1319 = vmatpush1.msra.mxu0 %v458
      %1320 = vmatprep.subr.mxu0 %v455
      %1321 = vmatpush1.msra.mxu0 %v454
      %1322 = vmatprep.subr.mxu0 %v451
      %1323 = vmatpush1.msra.mxu0 %v450
      %1324 = vmatprep.subr.mxu0 %v447
      %1325 = vmatpush1.msra.mxu0 %v446
      %1326 = vmatprep.subr.mxu0 %v443
      %1327 = vmatpush1.msra.mxu0 %v442
      %1328 = vmatprep.subr.mxu0 %v439
      %1329 = vmatpush1.msra.mxu0 %v438
      %1330 = vmatprep.subr.mxu0 %v435
      %1331 = vmatpush1.msra.mxu0 %v434
      %1332 = vmatprep.subr.mxu0 %v559
      %1333 = vmatpush2.msra.mxu0 %v558
      %1334 = vmatprep.subr.mxu0 %v555
      %1335 = vmatpush2.msra.mxu0 %v554
      %1336 = vmatprep.subr.mxu0 %v551
      %1337 = vmatpush2.msra.mxu0 %v550
      %1338 = vmatprep.subr.mxu0 %v547
      %1339 = vmatpush2.msra.mxu0 %v546
      %1340 = vmatprep.subr.mxu0 %v543
      %1341 = vmatpush2.msra.mxu0 %v542
      %1342 = vmatprep.subr.mxu0 %v539
      %1343 = vmatpush2.msra.mxu0 %v538
      %1344 = vmatprep.subr.mxu0 %v535
      %1345 = vmatpush2.msra.mxu0 %v534
      %1346 = vmatprep.subr.mxu0 %v531
      %1347 = vmatpush2.msra.mxu0 %v530
      %1348 = vmatprep.subr.mxu0 %v527
      %1349 = vmatpush2.msra.mxu0 %v526
      %1350 = vmatprep.subr.mxu0 %v523
      %1351 = vmatpush2.msra.mxu0 %v522
      %1352 = vmatprep.subr.mxu0 %v519
      %1353 = vmatpush2.msra.mxu0 %v518
      %1354 = vmatprep.subr.mxu0 %v515
      %1355 = vmatpush2.msra.mxu0 %v514
      %1356 = vmatprep.subr.mxu0 %v511
      %1357 = vmatpush2.msra.mxu0 %v510
      %1358 = vmatprep.subr.mxu0 %v507
      %1359 = vmatpush2.msra.mxu0 %v506
      %1360 = vmatprep.subr.mxu0 %v503
      %1361 = vmatpush2.msra.mxu0 %v502
      %1362 = vmatprep.subr.mxu0 %v499
      %1363 = vmatpush2.msra.mxu0 %v498
      %1364 = vmatprep.mubr.f32.mxu0 %v340
      %1365 = vmatmul.mubr.f32.gmra.mxu0 %v338
      %v1366 = vpop.f32.mrf.mxu0
      %v1367 = vadd.f32 0.0, %v1366
      %v1368 = vpop.f32.mrf.mxu0
      %v1369 = vadd.f32 0.0, %v1368
      %1370 = vmatprep.mubr.f32.mxu0 %v346
      %1371 = vmatmul.mubr.f32.gmra.mxu0 %v344
      %v1372 = vpop.f32.mrf.mxu0
      %v1373 = vadd.f32 0.0, %v1372
      %v1374 = vpop.f32.mrf.mxu0
      %v1375 = vadd.f32 0.0, %v1374
      %1376 = vmatprep.mubr.f32.mxu0 %v352
      %1377 = vmatmul.mubr.f32.gmra.mxu0 %v350
      %v1378 = vpop.f32.mrf.mxu0
      %v1379 = vadd.f32 0.0, %v1378
      %v1380 = vpop.f32.mrf.mxu0
      %v1381 = vadd.f32 0.0, %v1380
      %1382 = vmatprep.mubr.f32.mxu0 %v358
      %1383 = vmatmul.mubr.f32.gmra.mxu0 %v356
      %v1384 = vpop.f32.mrf.mxu0
      %v1385 = vadd.f32 0.0, %v1384
      %v1386 = vpop.f32.mrf.mxu0
      %v1387 = vadd.f32 0.0, %v1386
      %1388 = vdwg.mxu0
      %1389 = vmatprep.subr.mxu0 %v623
      %1390 = vmatpush1.msra.mxu0 %v622
      %1391 = vmatprep.subr.mxu0 %v619
      %1392 = vmatpush1.msra.mxu0 %v618
      %1393 = vmatprep.subr.mxu0 %v615
      %1394 = vmatpush1.msra.mxu0 %v614
      %1395 = vmatprep.subr.mxu0 %v611
      %1396 = vmatpush1.msra.mxu0 %v610
      %1397 = vmatprep.subr.mxu0 %v607
      %1398 = vmatpush1.msra.mxu0 %v606
      %1399 = vmatprep.subr.mxu0 %v603
      %1400 = vmatpush1.msra.mxu0 %v602
      %1401 = vmatprep.subr.mxu0 %v599
      %1402 = vmatpush1.msra.mxu0 %v598
      %1403 = vmatprep.subr.mxu0 %v595
      %1404 = vmatpush1.msra.mxu0 %v594
      %1405 = vmatprep.subr.mxu0 %v591
      %1406 = vmatpush1.msra.mxu0 %v590
      %1407 = vmatprep.subr.mxu0 %v587
      %1408 = vmatpush1.msra.mxu0 %v586
      %1409 = vmatprep.subr.mxu0 %v583
      %1410 = vmatpush1.msra.mxu0 %v582
      %1411 = vmatprep.subr.mxu0 %v579
      %1412 = vmatpush1.msra.mxu0 %v578
      %1413 = vmatprep.subr.mxu0 %v575
      %1414 = vmatpush1.msra.mxu0 %v574
      %1415 = vmatprep.subr.mxu0 %v571
      %1416 = vmatpush1.msra.mxu0 %v570
      %1417 = vmatprep.subr.mxu0 %v567
      %1418 = vmatpush1.msra.mxu0 %v566
      %1419 = vmatprep.subr.mxu0 %v563
      %1420 = vmatpush1.msra.mxu0 %v562
      %1421 = vmatprep.subr.mxu0 %v687
      %1422 = vmatpush2.msra.mxu0 %v686
      %1423 = vmatprep.subr.mxu0 %v683
      %1424 = vmatpush2.msra.mxu0 %v682
      %1425 = vmatprep.subr.mxu0 %v679
      %1426 = vmatpush2.msra.mxu0 %v678
      %1427 = vmatprep.subr.mxu0 %v675
      %1428 = vmatpush2.msra.mxu0 %v674
      %1429 = vmatprep.subr.mxu0 %v671
      %1430 = vmatpush2.msra.mxu0 %v670
      %1431 = vmatprep.subr.mxu0 %v667
      %1432 = vmatpush2.msra.mxu0 %v666
      %1433 = vmatprep.subr.mxu0 %v663
      %1434 = vmatpush2.msra.mxu0 %v662
      %1435 = vmatprep.subr.mxu0 %v659
      %1436 = vmatpush2.msra.mxu0 %v658
      %1437 = vmatprep.subr.mxu0 %v655
      %1438 = vmatpush2.msra.mxu0 %v654
      %1439 = vmatprep.subr.mxu0 %v651
      %1440 = vmatpush2.msra.mxu0 %v650
      %1441 = vmatprep.subr.mxu0 %v647
      %1442 = vmatpush2.msra.mxu0 %v646
      %1443 = vmatprep.subr.mxu0 %v643
      %1444 = vmatpush2.msra.mxu0 %v642
      %1445 = vmatprep.subr.mxu0 %v639
      %1446 = vmatpush2.msra.mxu0 %v638
      %1447 = vmatprep.subr.mxu0 %v635
      %1448 = vmatpush2.msra.mxu0 %v634
      %1449 = vmatprep.subr.mxu0 %v631
      %1450 = vmatpush2.msra.mxu0 %v630
      %1451 = vmatprep.subr.mxu0 %v627
      %1452 = vmatpush2.msra.mxu0 %v626
      %1453 = vmatprep.mubr.f32.mxu0 %v364
      %1454 = vmatmul.mubr.f32.gmra.mxu0 %v362
      %v1455 = vpop.f32.mrf.mxu0
      %v1456 = vadd.f32 %v1367, %v1455
      %v1457 = vpop.f32.mrf.mxu0
      %v1458 = vadd.f32 %v1369, %v1457
      %1459 = vmatprep.mubr.f32.mxu0 %v370
      %1460 = vmatmul.mubr.f32.gmra.mxu0 %v368
      %v1461 = vpop.f32.mrf.mxu0
      %v1462 = vadd.f32 %v1373, %v1461
      %v1463 = vpop.f32.mrf.mxu0
      %v1464 = vadd.f32 %v1375, %v1463
      %1465 = vmatprep.mubr.f32.mxu0 %v376
      %1466 = vmatmul.mubr.f32.gmra.mxu0 %v374
      %v1467 = vpop.f32.mrf.mxu0
      %v1468 = vadd.f32 %v1379, %v1467
      %v1469 = vpop.f32.mrf.mxu0
      %v1470 = vadd.f32 %v1381, %v1469
      %1471 = vmatprep.mubr.f32.mxu0 %v382
      %1472 = vmatmul.mubr.f32.gmra.mxu0 %v380
      %v1473 = vpop.f32.mrf.mxu0
      %v1474 = vadd.f32 %v1385, %v1473
      %v1475 = vpop.f32.mrf.mxu0
      %v1476 = vadd.f32 %v1387, %v1475
      %1477 = vdwg.mxu0
      %1478 = vmatprep.subr.mxu0 %v751
      %1479 = vmatpush1.msra.mxu0 %v750
      %1480 = vmatprep.subr.mxu0 %v747
      %1481 = vmatpush1.msra.mxu0 %v746
      %1482 = vmatprep.subr.mxu0 %v743
      %1483 = vmatpush1.msra.mxu0 %v742
      %1484 = vmatprep.subr.mxu0 %v739
      %1485 = vmatpush1.msra.mxu0 %v738
      %1486 = vmatprep.subr.mxu0 %v735
      %1487 = vmatpush1.msra.mxu0 %v734
      %1488 = vmatprep.subr.mxu0 %v731
      %1489 = vmatpush1.msra.mxu0 %v730
      %1490 = vmatprep.subr.mxu0 %v727
      %1491 = vmatpush1.msra.mxu0 %v726
      %1492 = vmatprep.subr.mxu0 %v723
      %1493 = vmatpush1.msra.mxu0 %v722
      %1494 = vmatprep.subr.mxu0 %v719
      %1495 = vmatpush1.msra.mxu0 %v718
      %1496 = vmatprep.subr.mxu0 %v715
      %1497 = vmatpush1.msra.mxu0 %v714
      %1498 = vmatprep.subr.mxu0 %v711
      %1499 = vmatpush1.msra.mxu0 %v710
      %1500 = vmatprep.subr.mxu0 %v707
      %1501 = vmatpush1.msra.mxu0 %v706
      %1502 = vmatprep.subr.mxu0 %v703
      %1503 = vmatpush1.msra.mxu0 %v702
      %1504 = vmatprep.subr.mxu0 %v699
      %1505 = vmatpush1.msra.mxu0 %v698
      %1506 = vmatprep.subr.mxu0 %v695
      %1507 = vmatpush1.msra.mxu0 %v694
      %1508 = vmatprep.subr.mxu0 %v691
      %1509 = vmatpush1.msra.mxu0 %v690
      %1510 = vmatprep.subr.mxu0 %v815
      %1511 = vmatpush2.msra.mxu0 %v814
      %1512 = vmatprep.subr.mxu0 %v811
      %1513 = vmatpush2.msra.mxu0 %v810
      %1514 = vmatprep.subr.mxu0 %v807
      %1515 = vmatpush2.msra.mxu0 %v806
      %1516 = vmatprep.subr.mxu0 %v803
      %1517 = vmatpush2.msra.mxu0 %v802
      %1518 = vmatprep.subr.mxu0 %v799
      %1519 = vmatpush2.msra.mxu0 %v798
      %1520 = vmatprep.subr.mxu0 %v795
      %1521 = vmatpush2.msra.mxu0 %v794
      %1522 = vmatprep.subr.mxu0 %v791
      %1523 = vmatpush2.msra.mxu0 %v790
      %1524 = vmatprep.subr.mxu0 %v787
      %1525 = vmatpush2.msra.mxu0 %v786
      %1526 = vmatprep.subr.mxu0 %v783
      %1527 = vmatpush2.msra.mxu0 %v782
      %1528 = vmatprep.subr.mxu0 %v779
      %1529 = vmatpush2.msra.mxu0 %v778
      %1530 = vmatprep.subr.mxu0 %v775
      %1531 = vmatpush2.msra.mxu0 %v774
      %1532 = vmatprep.subr.mxu0 %v771
      %1533 = vmatpush2.msra.mxu0 %v770
      %1534 = vmatprep.subr.mxu0 %v767
      %1535 = vmatpush2.msra.mxu0 %v766
      %1536 = vmatprep.subr.mxu0 %v763
      %1537 = vmatpush2.msra.mxu0 %v762
      %1538 = vmatprep.subr.mxu0 %v759
      %1539 = vmatpush2.msra.mxu0 %v758
      %1540 = vmatprep.subr.mxu0 %v755
      %1541 = vmatpush2.msra.mxu0 %v754
      %1542 = vmatprep.mubr.f32.mxu0 %v388
      %1543 = vmatmul.mubr.f32.gmra.mxu0 %v386
      %v1544 = vpop.f32.mrf.mxu0
      %v1545 = vadd.f32 %v1456, %v1544
      %v1546 = vpop.f32.mrf.mxu0
      %v1547 = vadd.f32 %v1458, %v1546
      %1548 = vmatprep.mubr.f32.mxu0 %v394
      %1549 = vmatmul.mubr.f32.gmra.mxu0 %v392
      %v1550 = vpop.f32.mrf.mxu0
      %v1551 = vadd.f32 %v1462, %v1550
      %v1552 = vpop.f32.mrf.mxu0
      %v1553 = vadd.f32 %v1464, %v1552
      %1554 = vmatprep.mubr.f32.mxu0 %v400
      %1555 = vmatmul.mubr.f32.gmra.mxu0 %v398
      %v1556 = vpop.f32.mrf.mxu0
      %v1557 = vadd.f32 %v1468, %v1556
      %v1558 = vpop.f32.mrf.mxu0
      %v1559 = vadd.f32 %v1470, %v1558
      %1560 = vmatprep.mubr.f32.mxu0 %v406
      %1561 = vmatmul.mubr.f32.gmra.mxu0 %v404
      %v1562 = vpop.f32.mrf.mxu0
      %v1563 = vadd.f32 %v1474, %v1562
      %v1564 = vpop.f32.mrf.mxu0
      %v1565 = vadd.f32 %v1476, %v1564
      %1566 = vdwg.mxu0
      %1567 = vmatprep.subr.mxu0 %v879
      %1568 = vmatpush1.msra.mxu0 %v878
      %1569 = vmatprep.subr.mxu0 %v875
      %1570 = vmatpush1.msra.mxu0 %v874
      %1571 = vmatprep.subr.mxu0 %v871
      %1572 = vmatpush1.msra.mxu0 %v870
      %1573 = vmatprep.subr.mxu0 %v867
      %1574 = vmatpush1.msra.mxu0 %v866
      %1575 = vmatprep.subr.mxu0 %v863
      %1576 = vmatpush1.msra.mxu0 %v862
      %1577 = vmatprep.subr.mxu0 %v859
      %1578 = vmatpush1.msra.mxu0 %v858
      %1579 = vmatprep.subr.mxu0 %v855
      %1580 = vmatpush1.msra.mxu0 %v854
      %1581 = vmatprep.subr.mxu0 %v851
      %1582 = vmatpush1.msra.mxu0 %v850
      %1583 = vmatprep.subr.mxu0 %v847
      %1584 = vmatpush1.msra.mxu0 %v846
      %1585 = vmatprep.subr.mxu0 %v843
      %1586 = vmatpush1.msra.mxu0 %v842
      %1587 = vmatprep.subr.mxu0 %v839
      %1588 = vmatpush1.msra.mxu0 %v838
      %1589 = vmatprep.subr.mxu0 %v835
      %1590 = vmatpush1.msra.mxu0 %v834
      %1591 = vmatprep.subr.mxu0 %v831
      %1592 = vmatpush1.msra.mxu0 %v830
      %1593 = vmatprep.subr.mxu0 %v827
      %1594 = vmatpush1.msra.mxu0 %v826
      %1595 = vmatprep.subr.mxu0 %v823
      %1596 = vmatpush1.msra.mxu0 %v822
      %1597 = vmatprep.subr.mxu0 %v819
      %1598 = vmatpush1.msra.mxu0 %v818
      %1599 = vmatprep.subr.mxu0 %v943
      %1600 = vmatpush2.msra.mxu0 %v942
      %1601 = vmatprep.subr.mxu0 %v939
      %1602 = vmatpush2.msra.mxu0 %v938
      %1603 = vmatprep.subr.mxu0 %v935
      %1604 = vmatpush2.msra.mxu0 %v934
      %1605 = vmatprep.subr.mxu0 %v931
      %1606 = vmatpush2.msra.mxu0 %v930
      %1607 = vmatprep.subr.mxu0 %v927
      %1608 = vmatpush2.msra.mxu0 %v926
      %1609 = vmatprep.subr.mxu0 %v923
      %1610 = vmatpush2.msra.mxu0 %v922
      %1611 = vmatprep.subr.mxu0 %v919
      %1612 = vmatpush2.msra.mxu0 %v918
      %1613 = vmatprep.subr.mxu0 %v915
      %1614 = vmatpush2.msra.mxu0 %v914
      %1615 = vmatprep.subr.mxu0 %v911
      %1616 = vmatpush2.msra.mxu0 %v910
      %1617 = vmatprep.subr.mxu0 %v907
      %1618 = vmatpush2.msra.mxu0 %v906
      %1619 = vmatprep.subr.mxu0 %v903
      %1620 = vmatpush2.msra.mxu0 %v902
      %1621 = vmatprep.subr.mxu0 %v899
      %1622 = vmatpush2.msra.mxu0 %v898
      %1623 = vmatprep.subr.mxu0 %v895
      %1624 = vmatpush2.msra.mxu0 %v894
      %1625 = vmatprep.subr.mxu0 %v891
      %1626 = vmatpush2.msra.mxu0 %v890
      %1627 = vmatprep.subr.mxu0 %v887
      %1628 = vmatpush2.msra.mxu0 %v886
      %1629 = vmatprep.subr.mxu0 %v883
      %1630 = vmatpush2.msra.mxu0 %v882
      %1631 = vmatprep.mubr.f32.mxu0 %v412
      %1632 = vmatmul.mubr.f32.gmra.mxu0 %v410
      %v1633 = vpop.f32.mrf.mxu0
      %v1634 = vadd.f32 %v1545, %v1633
      %v1635 = vpop.f32.mrf.mxu0
      %v1636 = vadd.f32 %v1547, %v1635
      %1637 = vmatprep.mubr.f32.mxu0 %v418
      %1638 = vmatmul.mubr.f32.gmra.mxu0 %v416
      %v1639 = vpop.f32.mrf.mxu0
      %v1640 = vadd.f32 %v1551, %v1639
      %v1641 = vpop.f32.mrf.mxu0
      %v1642 = vadd.f32 %v1553, %v1641
      %1643 = vmatprep.mubr.f32.mxu0 %v424
      %1644 = vmatmul.mubr.f32.gmra.mxu0 %v422
      %v1645 = vpop.f32.mrf.mxu0
      %v1646 = vadd.f32 %v1557, %v1645
      %v1647 = vpop.f32.mrf.mxu0
      %v1648 = vadd.f32 %v1559, %v1647
      %1649 = vmatprep.mubr.f32.mxu0 %v430
      %1650 = vmatmul.mubr.f32.gmra.mxu0 %v428
      %v1651 = vpop.f32.mrf.mxu0
      %v1652 = vadd.f32 %v1563, %v1651
      %v1653 = vpop.f32.mrf.mxu0
      %v1654 = vadd.f32 %v1565, %v1653
      %1655 = vdwg.mxu0
      %1660 = vrot.lane.b32.xlu0 %v1278, 96
      %v1661 = vpop.permute.xlu0 %1660
      %1662 = vrot.lane.b32.xlu0 %v1280, 96
      %v1663 = vpop.permute.xlu0 %1662
      %1664 = vrot.lane.b32.xlu0 %v1634, 96
      %v1665 = vpop.permute.xlu0 %1664
      %1666 = vrot.lane.b32.xlu0 %v1636, 96
      %v1667 = vpop.permute.xlu0 %1666
      %vm1668 = vcmask 785408
      %v1669 = vsel %vm1668, %v1661, %v1663
      %v1670 = vsel %vm1668, %v1663, %v1665
      %v1671 = vsel %vm1668, %v1665, %v1667
      %v1676 = vsel %vm1668, %v1667, 0.0
      %v1677 = vadd.f32 %v1669, 0.0
      %v1678 = vadd.f32 %v1670, 0.0
      %v1679 = vadd.f32 %v1671, 0.0
      %v1680 = vadd.f32 %v1676, 0.0
      %v1681 = vadd.f32 %v1284, 0.0
      %v1682 = vadd.f32 %v1286, 0.0
      %v1683 = vadd.f32 %v1640, 0.0
      %v1684 = vadd.f32 %v1642, 0.0
      %v1685 = vadd.f32 %v1677, %v1290
      %v1686 = vadd.f32 %v1678, %v1292
      %v1687 = vadd.f32 %v1679, %v1646
      %v1688 = vadd.f32 %v1680, %v1648
      %1693 = vrot.lane.b32.xlu0 %v1296, 32
      %v1694 = vpop.permute.xlu0 %1693
      %1695 = vrot.lane.b32.xlu0 %v1298, 32
      %v1696 = vpop.permute.xlu0 %1695
      %1697 = vrot.lane.b32.xlu0 %v1652, 32
      %v1698 = vpop.permute.xlu0 %1697
      %1699 = vrot.lane.b32.xlu0 %v1654, 32
      %v1700 = vpop.permute.xlu0 %1699
      %vm1701 = vcmask 261120
      %v1702 = vsel %vm1701, %v1694, %v1696
      %v1703 = vsel %vm1701, %v1696, %v1698
      %v1704 = vsel %vm1701, %v1698, %v1700
      %v1709 = vsel %vm1701, 0.0, %v1694
      %v1710 = vadd.f32 %v1681, %v1709
      %v1711 = vadd.f32 %v1682, %v1702
      %v1712 = vadd.f32 %v1683, %v1703
      %v1713 = vadd.f32 %v1684, %v1704
      %v1714 = vld [vmem:[%s3] sm:$0xff]
      %v1715 = vld [vmem:[%s3 + $0x8] sm:$0xff]
      %v1716 = vld [vmem:[%s3 + $0x10] sm:$0xff]
      %v1717 = vld [vmem:[%s3 + $0x18] sm:$0xff]
      %v1718 = vld [vmem:[%s3 + $0x20] sm:$0xff]
      %v1719 = vld [vmem:[%s3 + $0x28] sm:$0xff]
      %v1720 = vld [vmem:[%s3 + $0x30] sm:$0xff]
      %v1721 = vld [vmem:[%s3 + $0x38] sm:$0xff]
      %v1722 = vadd.f32 %v1710, %v1714
      %v1723 = vadd.f32 %v1711, %v1715
      %v1724 = vadd.f32 %v1712, %v1716
      %v1725 = vadd.f32 %v1713, %v1717
      %v1726 = vadd.f32 %v1685, %v1718
      %v1727 = vadd.f32 %v1686, %v1719
      %v1728 = vadd.f32 %v1687, %v1720
      %v1729 = vadd.f32 %v1688, %v1721
      %1730 = vst [vmem:[%s197] sm:$0xff] %v1722
      %1731 = vst [vmem:[%s197 + $0x8] sm:$0xff] %v1723
      %1732 = vst [vmem:[%s197 + $0x10] sm:$0xff] %v1724
      %1733 = vst [vmem:[%s197 + $0x18] sm:$0xff] %v1725
      %1734 = vst [vmem:[%s197 + $0x20] sm:$0xff] %v1726
      %1735 = vst [vmem:[%s197 + $0x28] sm:$0xff] %v1727
      %1736 = vst [vmem:[%s197 + $0x30] sm:$0xff] %v1728
      %1737 = vst [vmem:[%s197 + $0x38] sm:$0xff] %v1729
      %p1738 = scmp.lt.s32.totalorder %s15, 1
      %s1739 = scalar_select %p1738, %s15, 1
      %s1740 = smul.addr %s1739, 8
      %s1741 = smul.addr %s1740, 8
      %s1742 = scalar_lea.vmem %s4, %s1741
      // Predicated region
      $region37: #{coord_conv_transpose2d.1} parent=35 // pred_check
        %p1743 = pneg %p122
      $region38: #{coord_conv_transpose2d.1} parent=35 // pred_check_branch
        %1745 = sbr.rel (%p1743) target = $region40
      $region39: #{coord_conv_transpose2d.1} parent=35 // pred_region
        _
      $region40: #{coord_conv_transpose2d.1} parent=35 // pred_fallthru
        _
    $region36: #{coord_conv_transpose2d.1} parent=5 // pred_fallthru
      _
    %p1746 = scmp.le.s32.totalorder 2, %s10
    // Predicated region
    $region41: #{coord_conv_transpose2d.1} parent=5 // pred_check
      %p1747 = pneg %p1746
    $region42: #{coord_conv_transpose2d.1} parent=5 // pred_check_branch
      %1749 = sbr.rel (%p1747) target = $region44
    $region43: #{coord_conv_transpose2d.1} parent=5 // pred_region
      %s1750 = ssub.s32 %s10, 2
      // Predicated region
      $region45: #{coord_conv_transpose2d.1} parent=43 // pred_check
        %p1751 = pneg %p128
      $region46: #{coord_conv_transpose2d.1} parent=43 // pred_check_branch
        %1753 = sbr.rel (%p1751) target = $region48
      $region47: #{coord_conv_transpose2d.1} parent=43 // pred_region
        %p1754 = scmp.lt.s32.totalorder %s16, 1
        %s1755 = scalar_select %p1754, %s16, 1
        %s1756 = smul.addr %s1755, 8
        %s1757 = smul.addr %s1756, 8
        %s1758 = scalar_lea.vmem %s4, %s1757
      $region48: #{coord_conv_transpose2d.1} parent=43 // pred_fallthru
        _
    $region44: #{coord_conv_transpose2d.1} parent=5 // pred_fallthru
      _
  $region6: #{coord_conv_transpose2d.1} parent=0 // loop_footer
    %s14 = sadd.s32 1, %s10
  $region7: #{coord_conv_transpose2d.1} parent=0 // loop_footer_branch
    %9 = sbr.rel target = $region3
  $region8: #{coord_conv_transpose2d.1} parent=0 // loop_exit
    _

</llo_original>
